<compile_context>
chip_gen: v7x
topology: tpu7x:2x2x1
jax: 0.10.0
libtpu: 0.0.40
codegen_flags: <defaults>
</compile_context>

<pallas_src>
import functools

import jax
import jax.numpy as jnp
from jax import lax
from jax.experimental import pallas as pl
from jax.experimental.pallas import tpu as pltpu

GP = 128  # packed gate block width (= lane width)


def decoder_rnn_kernel(x_ref, h0_ref,
                       w_ih_ref, w_hh_ref, b_gi_ref, b_hn_ref,
                       w_hid_ref, b_hid_ref, w_out_ref, b_out_ref,
                       logp_ref, hT_ref, gi_ref, *, hidden_size):
    S, TB, I = x_ref.shape
    H = hidden_size

    # ---- Hoisted input projection for ALL timesteps (independent of h, so off the
    # serial critical path).  Staged into a VMEM scratch so it is not held live in
    # vregs across the recurrence; per-step reads slice the ref.
    for t in range(S):  # S is small & static; shared RHS keeps MXU weights loaded
        gi_ref[t] = (jnp.dot(x_ref[t], w_ih_ref[...],
                             preferred_element_type=jnp.float32) + b_gi_ref[...])

    def gru_step(gi_t, h):
        # Packed gate layout in one 128-lane block: n @ [0:H), r @ [H:2H), z @ [2H:3H).
        # W_hh rows [H:128) and cols [3H:128) are zero, so garbage in padded h lanes
        # never leaks into valid lanes.
        gh = (jnp.dot(h, w_hh_ref[...], preferred_element_type=jnp.float32)
              + b_hn_ref[...])                             # n block: h@W_hn + b_hn
        s = jax.nn.sigmoid(gi_t + gh)                      # r valid @ [H:2H), z @ [2H:3H)
        r_n = pltpu.roll(s, shift=GP - H, axis=1)          # r aligned to [0:H)   (XLU)
        z_n = pltpu.roll(s, shift=GP - 2 * H, axis=1)      # z aligned to [0:H)   (XLU)
        n = jnp.tanh(gi_t + r_n * gh)                      # valid @ [0:H)
        return n + z_n * (h - n)                           # (1-z)*n + z*h, valid @ [0:H)

    # ---- Peeled step 0.  The head depends only on output[0] = h after step 0, so it
    # is issued here and can overlap with the remaining recurrence steps.
    h1 = gru_step(gi_ref[0], h0_ref[...])

    hid = (jnp.dot(h1, w_hid_ref[...], preferred_element_type=jnp.float32)
           + b_hid_ref[...])
    hid = jnp.maximum(hid, 0.0)
    # Padded vocab cols carry -1e30 bias -> exp underflows to 0, so log-softmax is exact.
    logits = (jnp.dot(hid, w_out_ref[...], preferred_element_type=jnp.float32)
              + b_out_ref[...])
    m = jnp.max(logits, axis=1, keepdims=True)
    y = logits - m
    lse = jnp.log(jnp.sum(jnp.exp(y), axis=1, keepdims=True))
    logp_ref[...] = y - lse                                # lane-dense (TB, 128) store

    # ---- Remaining recurrence steps 1..S-1: unrolled fori_loop keeps LLO scheduling
    # visibility while bounding live ranges (carry is a single (TB,128) vreg row).
    def body(t, h):
        return gru_step(gi_ref[t], h)

    hT_ref[...] = lax.fori_loop(1, S, body, h1, unroll=True)


def init_params(key, hidden_size, output_size):
    """PyTorch-layout parameters (like nn.GRU / nn.Linear would hold)."""
    H, O = hidden_size, output_size
    ks = jax.random.split(key, 8)
    s_gru = 1.0 / jnp.sqrt(H)
    s_hid = 1.0 / jnp.sqrt(H)
    s_out = 1.0 / jnp.sqrt(128)
    u = lambda k, shape, s: jax.random.uniform(k, shape, jnp.float32, -s, s)
    return {
        "w_ih": u(ks[0], (3 * H, O), s_gru),   # (3H, input)  gate order r, z, n
        "w_hh": u(ks[1], (3 * H, H), s_gru),
        "b_ih": u(ks[2], (3 * H,), s_gru),
        "b_hh": u(ks[3], (3 * H,), s_gru),
        "w_hid": u(ks[4], (128, H), s_hid),    # Linear(hidden_size, 128)
        "b_hid": u(ks[5], (128,), s_hid),
        "w_out": u(ks[6], (O, 128), s_out),    # Linear(128, output_size)
        "b_out": u(ks[7], (O,), s_out),
    }


def prepare_kernel_params(params, hidden_size, output_size):
    """One-time transpose + single-block gate packing into the kernel's layout."""
    H, O = hidden_size, output_size
    if 3 * H > GP:
        raise ValueError("packed-gate kernel requires 3*hidden_size <= 128")
    if O > GP:
        raise ValueError("head requires output_size <= 128")
    f32 = jnp.float32

    def pack_gate_cols(w):  # (in, 3H) torch order (r,z,n) -> (in, 128) packed (n,r,z)
        out = jnp.zeros((w.shape[0], GP), f32)
        out = out.at[:, 0:H].set(w[:, 2 * H:3 * H])      # n
        out = out.at[:, H:2 * H].set(w[:, 0:H])          # r
        out = out.at[:, 2 * H:3 * H].set(w[:, H:2 * H])  # z
        return out

    def pack_gate_vec(b):   # (3H,) -> (1, 128) packed (n,r,z)
        out = jnp.zeros((1, GP), f32)
        out = out.at[0, 0:H].set(b[2 * H:3 * H])
        out = out.at[0, H:2 * H].set(b[0:H])
        out = out.at[0, 2 * H:3 * H].set(b[H:2 * H])
        return out

    w_ih_p = pack_gate_cols(params["w_ih"].T.astype(f32))                     # (I, 128)
    w_hh_p = jnp.zeros((GP, GP), f32).at[:H, :].set(
        pack_gate_cols(params["w_hh"].T.astype(f32)))                         # (128, 128)

    b_ih_p = pack_gate_vec(params["b_ih"].astype(f32))
    b_hh_p = pack_gate_vec(params["b_hh"].astype(f32))
    # Fold b_hh for r/z into the hoisted projection bias; keep n-gate b_hh separate.
    b_gi = b_ih_p.at[:, H:3 * H].add(b_hh_p[:, H:3 * H])
    b_hn = jnp.zeros((1, GP), f32).at[:, :H].set(b_hh_p[:, :H])

    w_hid_p = jnp.zeros((GP, 128), f32).at[:H, :].set(params["w_hid"].T.astype(f32))
    b_hid_p = params["b_hid"].reshape(1, 128).astype(f32)
    w_out_p = jnp.zeros((128, GP), f32).at[:, :O].set(params["w_out"].T.astype(f32))
    b_out_p = jnp.full((1, GP), -1e30, f32).at[0, :O].set(params["b_out"].astype(f32))

    return {
        "w_ih": w_ih_p, "w_hh": w_hh_p, "b_gi": b_gi, "b_hn": b_hn,
        "w_hid": w_hid_p, "b_hid": b_hid_p, "w_out": w_out_p, "b_out": b_out_p,
    }


@functools.partial(jax.jit, static_argnames=("hidden_size", "output_size"))
def decoder_rnn_forward(x, hidden, kparams, *, hidden_size, output_size):
    """x: (S, B, output_size) f32; hidden: (1, B, hidden_size) f32.  B % 8 == 0.
    Returns (log_probs (B, output_size), hidden (1, B, hidden_size)) like the torch module."""
    S, B, I = x.shape
    H, O = hidden_size, output_size
    if B % 8 != 0:
        # TODO(synk): support ragged batch via a masked last batch tile.
        raise ValueError("decoder_rnn_forward requires batch % 8 == 0")

    TB = 128 if B % 128 == 0 else B        # batch tile per grid step (>=128 for real B)
    grid = (B // TB,)

    x = x.astype(jnp.float32)              # passed through untouched (time, batch, in)
    h0 = jnp.zeros((B, GP), jnp.float32).at[:, :H].set(hidden[0].astype(jnp.float32))

    kernel = functools.partial(decoder_rnn_kernel, hidden_size=H)

    def full(a):  # whole-array block, same for every batch tile (not re-fetched)
        return pl.BlockSpec(a.shape, lambda b, _nd=a.ndim: (0,) * _nd)

    in_specs = [
        pl.BlockSpec((S, TB, I), lambda b: (0, b, 0)),   # x
        pl.BlockSpec((TB, GP), lambda b: (b, 0)),        # h0 (lane-padded)
        full(kparams["w_ih"]), full(kparams["w_hh"]),
        full(kparams["b_gi"]), full(kparams["b_hn"]),
        full(kparams["w_hid"]), full(kparams["b_hid"]),
        full(kparams["w_out"]), full(kparams["b_out"]),
    ]
    out_specs = (pl.BlockSpec((TB, GP), lambda b: (b, 0)),
                 pl.BlockSpec((TB, GP), lambda b: (b, 0)))

    logp_p, hT_p = pl.pallas_call(
        kernel,
        grid=grid,
        in_specs=in_specs,
        out_specs=out_specs,
        out_shape=(jax.ShapeDtypeStruct((B, GP), jnp.float32),
                   jax.ShapeDtypeStruct((B, GP), jnp.float32)),
        scratch_shapes=[pltpu.VMEM((S, TB, GP), jnp.float32)],   # staged x @ W_ih
        compiler_params=pltpu.CompilerParams(
            dimension_semantics=("parallel",)),
    )(x, h0,
      kparams["w_ih"], kparams["w_hh"], kparams["b_gi"], kparams["b_hn"],
      kparams["w_hid"], kparams["b_hid"], kparams["w_out"], kparams["b_out"])

    return logp_p[:, :O], hT_p[:, :H][None]


def decoder_rnn_reference(x, hidden, params):
    """Pure-JAX reference of the PyTorch forward (for verification)."""
    H = hidden.shape[-1]

    def step(h, xt):
        gi = xt @ params["w_ih"].T + params["b_ih"]
        gh = h @ params["w_hh"].T + params["b_hh"]
        i_r, i_z, i_n = gi[:, :H], gi[:, H:2 * H], gi[:, 2 * H:]
        h_r, h_z, h_n = gh[:, :H], gh[:, H:2 * H], gh[:, 2 * H:]
        r = jax.nn.sigmoid(i_r + h_r)
        z = jax.nn.sigmoid(i_z + h_z)
        n = jnp.tanh(i_n + r * h_n)
        h_new = (1.0 - z) * n + z * h
        return h_new, h_new

    hT, outs = lax.scan(step, hidden[0], x)
    hid = jax.nn.relu(outs[0] @ params["w_hid"].T + params["b_hid"])
    logits = hid @ params["w_out"].T + params["b_out"]
    return jax.nn.log_softmax(logits, axis=1), hT[None]


if __name__ == "__main__":
    hidden_size = 32
    output_size = 16
    seq_len = 8
    batch = 8          # API requires batch % 8 == 0 (full sublane tile, no repacking)

    key = jax.random.PRNGKey(0)
    k_p, k_x, k_h = jax.random.split(key, 3)
    params = init_params(k_p, hidden_size, output_size)
    kparams = prepare_kernel_params(params, hidden_size, output_size)  # one-time prep

    x = jax.random.normal(k_x, (seq_len, batch, output_size), jnp.float32)
    h0 = jax.random.normal(k_h, (1, batch, hidden_size), jnp.float32)

    logp, hT = decoder_rnn_forward(x, h0, kparams,
                                   hidden_size=hidden_size, output_size=output_size)
    jax.block_until_ready((logp, hT))

    ref_logp, ref_hT = decoder_rnn_reference(x, h0, params)
    assert logp.shape == (batch, output_size) and hT.shape == (1, batch, hidden_size)
    assert jnp.allclose(logp, ref_logp, atol=1e-4, rtol=1e-4)
    assert jnp.allclose(hT, ref_hT, atol=1e-4, rtol=1e-4)

    print("KERNEL_OK")
</pallas_src>

<mosaic_0001>
module attributes {stable_mosaic.version = 11 : i64} {
  func.func @decoder_rnn_kernel(%arg0: i32, %arg1: memref<8x8x16xf32, #tpu.memory_space<vmem>>, %arg2: memref<8x128xf32, #tpu.memory_space<vmem>>, %arg3: memref<16x128xf32, #tpu.memory_space<vmem>>, %arg4: memref<128x128xf32, #tpu.memory_space<vmem>>, %arg5: memref<1x128xf32, #tpu.memory_space<vmem>>, %arg6: memref<1x128xf32, #tpu.memory_space<vmem>>, %arg7: memref<128x128xf32, #tpu.memory_space<vmem>>, %arg8: memref<1x128xf32, #tpu.memory_space<vmem>>, %arg9: memref<128x128xf32, #tpu.memory_space<vmem>>, %arg10: memref<1x128xf32, #tpu.memory_space<vmem>>, %arg11: memref<8x128xf32, #tpu.memory_space<vmem>>, %arg12: memref<8x128xf32, #tpu.memory_space<vmem>>, %arg13: memref<8x8x128xf32, #tpu.memory_space<vmem>>) attributes {dimension_semantics = [#tpu.dimension_semantics<parallel>], iteration_bounds = array<i64: 1>, scalar_prefetch = 0 : i64, scratch_operands = 1 : i64, tpu.core_type = #tpu.core_type<tc>, window_params = [{transform_indices = @transform_0, window_bounds = array<i64: 8, 8, 16>}, {transform_indices = @transform_1, window_bounds = array<i64: 8, 128>}, {pipeline_mode = #tpu.pipeline_mode<synchronous>, transform_indices = @transform_2, window_bounds = array<i64: 16, 128>}, {pipeline_mode = #tpu.pipeline_mode<synchronous>, transform_indices = @transform_3, window_bounds = array<i64: 128, 128>}, {pipeline_mode = #tpu.pipeline_mode<synchronous>, transform_indices = @transform_4, window_bounds = array<i64: 1, 128>}, {pipeline_mode = #tpu.pipeline_mode<synchronous>, transform_indices = @transform_5, window_bounds = array<i64: 1, 128>}, {pipeline_mode = #tpu.pipeline_mode<synchronous>, transform_indices = @transform_6, window_bounds = array<i64: 128, 128>}, {pipeline_mode = #tpu.pipeline_mode<synchronous>, transform_indices = @transform_7, window_bounds = array<i64: 1, 128>}, {pipeline_mode = #tpu.pipeline_mode<synchronous>, transform_indices = @transform_8, window_bounds = array<i64: 128, 128>}, {pipeline_mode = #tpu.pipeline_mode<synchronous>, transform_indices = @transform_9, window_bounds = array<i64: 1, 128>}, {transform_indices = @transform_10, window_bounds = array<i64: 8, 128>}, {transform_indices = @transform_11, window_bounds = array<i64: 8, 128>}]} {
    %c0 = arith.constant 0 : index
    %c0_0 = arith.constant 0 : index
    %c0_1 = arith.constant 0 : index
    %0 = vector.load %arg1[%c0, %c0_0, %c0_1] : memref<8x8x16xf32, #tpu.memory_space<vmem>>, vector<1x8x16xf32>
    %1 = vector.shape_cast %0 : vector<1x8x16xf32> to vector<8x16xf32>
    %c0_2 = arith.constant 0 : index
    %c0_3 = arith.constant 0 : index
    %2 = vector.load %arg3[%c0_2, %c0_3] : memref<16x128xf32, #tpu.memory_space<vmem>>, vector<16x128xf32>
    %cst = arith.constant dense<0.000000e+00> : vector<8x128xf32>
    %3 = tpu.matmul %1, %2, %cst {dimension_numbers = #tpu.dot_dimension_numbers<[1], [0], [0], [1], [0, 0, 1, 1], [], []>} : vector<8x16xf32>, vector<16x128xf32>, vector<8x128xf32> -> vector<8x128xf32>
    %c0_4 = arith.constant 0 : index
    %c0_5 = arith.constant 0 : index
    %4 = vector.load %arg5[%c0_4, %c0_5] : memref<1x128xf32, #tpu.memory_space<vmem>>, vector<1x128xf32>
    %5 = vector.broadcast %4 : vector<1x128xf32> to vector<8x128xf32>
    %6 = arith.addf %3, %5 : vector<8x128xf32>
    %c0_6 = arith.constant 0 : index
    %c0_7 = arith.constant 0 : index
    %c0_8 = arith.constant 0 : index
    %7 = vector.load %arg13[%c0_6, %c0_7, %c0_8] : memref<8x8x128xf32, #tpu.memory_space<vmem>>, vector<1x8x128xf32>
    %8 = vector.shape_cast %7 : vector<1x8x128xf32> to vector<8x128xf32>
    %9 = vector.shape_cast %6 : vector<8x128xf32> to vector<1x8x128xf32>
    tpu.vector_store %arg13[%c0_6, %c0_7, %c0_8], %9 {strides = array<i32>} : memref<8x8x128xf32, #tpu.memory_space<vmem>>, vector<1x8x128xf32>,
    %c1 = arith.constant 1 : index
    %c0_9 = arith.constant 0 : index
    %c0_10 = arith.constant 0 : index
    %10 = vector.load %arg1[%c1, %c0_9, %c0_10] : memref<8x8x16xf32, #tpu.memory_space<vmem>>, vector<1x8x16xf32>
    %11 = vector.shape_cast %10 : vector<1x8x16xf32> to vector<8x16xf32>
    %c0_11 = arith.constant 0 : index
    %c0_12 = arith.constant 0 : index
    %12 = vector.load %arg3[%c0_11, %c0_12] : memref<16x128xf32, #tpu.memory_space<vmem>>, vector<16x128xf32>
    %cst_13 = arith.constant dense<0.000000e+00> : vector<8x128xf32>
    %13 = tpu.matmul %11, %12, %cst_13 {dimension_numbers = #tpu.dot_dimension_numbers<[1], [0], [0], [1], [0, 0, 1, 1], [], []>} : vector<8x16xf32>, vector<16x128xf32>, vector<8x128xf32> -> vector<8x128xf32>
    %c0_14 = arith.constant 0 : index
    %c0_15 = arith.constant 0 : index
    %14 = vector.load %arg5[%c0_14, %c0_15] : memref<1x128xf32, #tpu.memory_space<vmem>>, vector<1x128xf32>
    %15 = vector.broadcast %14 : vector<1x128xf32> to vector<8x128xf32>
    %16 = arith.addf %13, %15 : vector<8x128xf32>
    %c1_16 = arith.constant 1 : index
    %c0_17 = arith.constant 0 : index
    %c0_18 = arith.constant 0 : index
    %17 = vector.load %arg13[%c1_16, %c0_17, %c0_18] : memref<8x8x128xf32, #tpu.memory_space<vmem>>, vector<1x8x128xf32>
    %18 = vector.shape_cast %17 : vector<1x8x128xf32> to vector<8x128xf32>
    %19 = vector.shape_cast %16 : vector<8x128xf32> to vector<1x8x128xf32>
    tpu.vector_store %arg13[%c1_16, %c0_17, %c0_18], %19 {strides = array<i32>} : memref<8x8x128xf32, #tpu.memory_space<vmem>>, vector<1x8x128xf32>,
    %c2 = arith.constant 2 : index
    %c0_19 = arith.constant 0 : index
    %c0_20 = arith.constant 0 : index
    %20 = vector.load %arg1[%c2, %c0_19, %c0_20] : memref<8x8x16xf32, #tpu.memory_space<vmem>>, vector<1x8x16xf32>
    %21 = vector.shape_cast %20 : vector<1x8x16xf32> to vector<8x16xf32>
    %c0_21 = arith.constant 0 : index
    %c0_22 = arith.constant 0 : index
    %22 = vector.load %arg3[%c0_21, %c0_22] : memref<16x128xf32, #tpu.memory_space<vmem>>, vector<16x128xf32>
    %cst_23 = arith.constant dense<0.000000e+00> : vector<8x128xf32>
    %23 = tpu.matmul %21, %22, %cst_23 {dimension_numbers = #tpu.dot_dimension_numbers<[1], [0], [0], [1], [0, 0, 1, 1], [], []>} : vector<8x16xf32>, vector<16x128xf32>, vector<8x128xf32> -> vector<8x128xf32>
    %c0_24 = arith.constant 0 : index
    %c0_25 = arith.constant 0 : index
    %24 = vector.load %arg5[%c0_24, %c0_25] : memref<1x128xf32, #tpu.memory_space<vmem>>, vector<1x128xf32>
    %25 = vector.broadcast %24 : vector<1x128xf32> to vector<8x128xf32>
    %26 = arith.addf %23, %25 : vector<8x128xf32>
    %c2_26 = arith.constant 2 : index
    %c0_27 = arith.constant 0 : index
    %c0_28 = arith.constant 0 : index
    %27 = vector.load %arg13[%c2_26, %c0_27, %c0_28] : memref<8x8x128xf32, #tpu.memory_space<vmem>>, vector<1x8x128xf32>
    %28 = vector.shape_cast %27 : vector<1x8x128xf32> to vector<8x128xf32>
    %29 = vector.shape_cast %26 : vector<8x128xf32> to vector<1x8x128xf32>
    tpu.vector_store %arg13[%c2_26, %c0_27, %c0_28], %29 {strides = array<i32>} : memref<8x8x128xf32, #tpu.memory_space<vmem>>, vector<1x8x128xf32>,
    %c3 = arith.constant 3 : index
    %c0_29 = arith.constant 0 : index
    %c0_30 = arith.constant 0 : index
    %30 = vector.load %arg1[%c3, %c0_29, %c0_30] : memref<8x8x16xf32, #tpu.memory_space<vmem>>, vector<1x8x16xf32>
    %31 = vector.shape_cast %30 : vector<1x8x16xf32> to vector<8x16xf32>
    %c0_31 = arith.constant 0 : index
    %c0_32 = arith.constant 0 : index
    %32 = vector.load %arg3[%c0_31, %c0_32] : memref<16x128xf32, #tpu.memory_space<vmem>>, vector<16x128xf32>
    %cst_33 = arith.constant dense<0.000000e+00> : vector<8x128xf32>
    %33 = tpu.matmul %31, %32, %cst_33 {dimension_numbers = #tpu.dot_dimension_numbers<[1], [0], [0], [1], [0, 0, 1, 1], [], []>} : vector<8x16xf32>, vector<16x128xf32>, vector<8x128xf32> -> vector<8x128xf32>
    %c0_34 = arith.constant 0 : index
    %c0_35 = arith.constant 0 : index
    %34 = vector.load %arg5[%c0_34, %c0_35] : memref<1x128xf32, #tpu.memory_space<vmem>>, vector<1x128xf32>
    %35 = vector.broadcast %34 : vector<1x128xf32> to vector<8x128xf32>
    %36 = arith.addf %33, %35 : vector<8x128xf32>
    %c3_36 = arith.constant 3 : index
    %c0_37 = arith.constant 0 : index
    %c0_38 = arith.constant 0 : index
    %37 = vector.load %arg13[%c3_36, %c0_37, %c0_38] : memref<8x8x128xf32, #tpu.memory_space<vmem>>, vector<1x8x128xf32>
    %38 = vector.shape_cast %37 : vector<1x8x128xf32> to vector<8x128xf32>
    %39 = vector.shape_cast %36 : vector<8x128xf32> to vector<1x8x128xf32>
    tpu.vector_store %arg13[%c3_36, %c0_37, %c0_38], %39 {strides = array<i32>} : memref<8x8x128xf32, #tpu.memory_space<vmem>>, vector<1x8x128xf32>,
    %c4 = arith.constant 4 : index
    %c0_39 = arith.constant 0 : index
    %c0_40 = arith.constant 0 : index
    %40 = vector.load %arg1[%c4, %c0_39, %c0_40] : memref<8x8x16xf32, #tpu.memory_space<vmem>>, vector<1x8x16xf32>
    %41 = vector.shape_cast %40 : vector<1x8x16xf32> to vector<8x16xf32>
    %c0_41 = arith.constant 0 : index
    %c0_42 = arith.constant 0 : index
    %42 = vector.load %arg3[%c0_41, %c0_42] : memref<16x128xf32, #tpu.memory_space<vmem>>, vector<16x128xf32>
    %cst_43 = arith.constant dense<0.000000e+00> : vector<8x128xf32>
    %43 = tpu.matmul %41, %42, %cst_43 {dimension_numbers = #tpu.dot_dimension_numbers<[1], [0], [0], [1], [0, 0, 1, 1], [], []>} : vector<8x16xf32>, vector<16x128xf32>, vector<8x128xf32> -> vector<8x128xf32>
    %c0_44 = arith.constant 0 : index
    %c0_45 = arith.constant 0 : index
    %44 = vector.load %arg5[%c0_44, %c0_45] : memref<1x128xf32, #tpu.memory_space<vmem>>, vector<1x128xf32>
    %45 = vector.broadcast %44 : vector<1x128xf32> to vector<8x128xf32>
    %46 = arith.addf %43, %45 : vector<8x128xf32>
    %c4_46 = arith.constant 4 : index
    %c0_47 = arith.constant 0 : index
    %c0_48 = arith.constant 0 : index
    %47 = vector.load %arg13[%c4_46, %c0_47, %c0_48] : memref<8x8x128xf32, #tpu.memory_space<vmem>>, vector<1x8x128xf32>
    %48 = vector.shape_cast %47 : vector<1x8x128xf32> to vector<8x128xf32>
    %49 = vector.shape_cast %46 : vector<8x128xf32> to vector<1x8x128xf32>
    tpu.vector_store %arg13[%c4_46, %c0_47, %c0_48], %49 {strides = array<i32>} : memref<8x8x128xf32, #tpu.memory_space<vmem>>, vector<1x8x128xf32>,
    %c5 = arith.constant 5 : index
    %c0_49 = arith.constant 0 : index
    %c0_50 = arith.constant 0 : index
    %50 = vector.load %arg1[%c5, %c0_49, %c0_50] : memref<8x8x16xf32, #tpu.memory_space<vmem>>, vector<1x8x16xf32>
    %51 = vector.shape_cast %50 : vector<1x8x16xf32> to vector<8x16xf32>
    %c0_51 = arith.constant 0 : index
    %c0_52 = arith.constant 0 : index
    %52 = vector.load %arg3[%c0_51, %c0_52] : memref<16x128xf32, #tpu.memory_space<vmem>>, vector<16x128xf32>
    %cst_53 = arith.constant dense<0.000000e+00> : vector<8x128xf32>
    %53 = tpu.matmul %51, %52, %cst_53 {dimension_numbers = #tpu.dot_dimension_numbers<[1], [0], [0], [1], [0, 0, 1, 1], [], []>} : vector<8x16xf32>, vector<16x128xf32>, vector<8x128xf32> -> vector<8x128xf32>
    %c0_54 = arith.constant 0 : index
    %c0_55 = arith.constant 0 : index
    %54 = vector.load %arg5[%c0_54, %c0_55] : memref<1x128xf32, #tpu.memory_space<vmem>>, vector<1x128xf32>
    %55 = vector.broadcast %54 : vector<1x128xf32> to vector<8x128xf32>
    %56 = arith.addf %53, %55 : vector<8x128xf32>
    %c5_56 = arith.constant 5 : index
    %c0_57 = arith.constant 0 : index
    %c0_58 = arith.constant 0 : index
    %57 = vector.load %arg13[%c5_56, %c0_57, %c0_58] : memref<8x8x128xf32, #tpu.memory_space<vmem>>, vector<1x8x128xf32>
    %58 = vector.shape_cast %57 : vector<1x8x128xf32> to vector<8x128xf32>
    %59 = vector.shape_cast %56 : vector<8x128xf32> to vector<1x8x128xf32>
    tpu.vector_store %arg13[%c5_56, %c0_57, %c0_58], %59 {strides = array<i32>} : memref<8x8x128xf32, #tpu.memory_space<vmem>>, vector<1x8x128xf32>,
    %c6 = arith.constant 6 : index
    %c0_59 = arith.constant 0 : index
    %c0_60 = arith.constant 0 : index
    %60 = vector.load %arg1[%c6, %c0_59, %c0_60] : memref<8x8x16xf32, #tpu.memory_space<vmem>>, vector<1x8x16xf32>
    %61 = vector.shape_cast %60 : vector<1x8x16xf32> to vector<8x16xf32>
    %c0_61 = arith.constant 0 : index
    %c0_62 = arith.constant 0 : index
    %62 = vector.load %arg3[%c0_61, %c0_62] : memref<16x128xf32, #tpu.memory_space<vmem>>, vector<16x128xf32>
    %cst_63 = arith.constant dense<0.000000e+00> : vector<8x128xf32>
    %63 = tpu.matmul %61, %62, %cst_63 {dimension_numbers = #tpu.dot_dimension_numbers<[1], [0], [0], [1], [0, 0, 1, 1], [], []>} : vector<8x16xf32>, vector<16x128xf32>, vector<8x128xf32> -> vector<8x128xf32>
    %c0_64 = arith.constant 0 : index
    %c0_65 = arith.constant 0 : index
    %64 = vector.load %arg5[%c0_64, %c0_65] : memref<1x128xf32, #tpu.memory_space<vmem>>, vector<1x128xf32>
    %65 = vector.broadcast %64 : vector<1x128xf32> to vector<8x128xf32>
    %66 = arith.addf %63, %65 : vector<8x128xf32>
    %c6_66 = arith.constant 6 : index
    %c0_67 = arith.constant 0 : index
    %c0_68 = arith.constant 0 : index
    %67 = vector.load %arg13[%c6_66, %c0_67, %c0_68] : memref<8x8x128xf32, #tpu.memory_space<vmem>>, vector<1x8x128xf32>
    %68 = vector.shape_cast %67 : vector<1x8x128xf32> to vector<8x128xf32>
    %69 = vector.shape_cast %66 : vector<8x128xf32> to vector<1x8x128xf32>
    tpu.vector_store %arg13[%c6_66, %c0_67, %c0_68], %69 {strides = array<i32>} : memref<8x8x128xf32, #tpu.memory_space<vmem>>, vector<1x8x128xf32>,
    %c7 = arith.constant 7 : index
    %c0_69 = arith.constant 0 : index
    %c0_70 = arith.constant 0 : index
    %70 = vector.load %arg1[%c7, %c0_69, %c0_70] : memref<8x8x16xf32, #tpu.memory_space<vmem>>, vector<1x8x16xf32>
    %71 = vector.shape_cast %70 : vector<1x8x16xf32> to vector<8x16xf32>
    %c0_71 = arith.constant 0 : index
    %c0_72 = arith.constant 0 : index
    %72 = vector.load %arg3[%c0_71, %c0_72] : memref<16x128xf32, #tpu.memory_space<vmem>>, vector<16x128xf32>
    %cst_73 = arith.constant dense<0.000000e+00> : vector<8x128xf32>
    %73 = tpu.matmul %71, %72, %cst_73 {dimension_numbers = #tpu.dot_dimension_numbers<[1], [0], [0], [1], [0, 0, 1, 1], [], []>} : vector<8x16xf32>, vector<16x128xf32>, vector<8x128xf32> -> vector<8x128xf32>
    %c0_74 = arith.constant 0 : index
    %c0_75 = arith.constant 0 : index
    %74 = vector.load %arg5[%c0_74, %c0_75] : memref<1x128xf32, #tpu.memory_space<vmem>>, vector<1x128xf32>
    %75 = vector.broadcast %74 : vector<1x128xf32> to vector<8x128xf32>
    %76 = arith.addf %73, %75 : vector<8x128xf32>
    %c7_76 = arith.constant 7 : index
    %c0_77 = arith.constant 0 : index
    %c0_78 = arith.constant 0 : index
    %77 = vector.load %arg13[%c7_76, %c0_77, %c0_78] : memref<8x8x128xf32, #tpu.memory_space<vmem>>, vector<1x8x128xf32>
    %78 = vector.shape_cast %77 : vector<1x8x128xf32> to vector<8x128xf32>
    %79 = vector.shape_cast %76 : vector<8x128xf32> to vector<1x8x128xf32>
    tpu.vector_store %arg13[%c7_76, %c0_77, %c0_78], %79 {strides = array<i32>} : memref<8x8x128xf32, #tpu.memory_space<vmem>>, vector<1x8x128xf32>,
    %c0_79 = arith.constant 0 : index
    %c0_80 = arith.constant 0 : index
    %c0_81 = arith.constant 0 : index
    %80 = vector.load %arg13[%c0_79, %c0_80, %c0_81] : memref<8x8x128xf32, #tpu.memory_space<vmem>>, vector<1x8x128xf32>
    %81 = vector.shape_cast %80 : vector<1x8x128xf32> to vector<8x128xf32>
    %c0_82 = arith.constant 0 : index
    %c0_83 = arith.constant 0 : index
    %82 = vector.load %arg2[%c0_82, %c0_83] : memref<8x128xf32, #tpu.memory_space<vmem>>, vector<8x128xf32>
    %c0_84 = arith.constant 0 : index
    %c0_85 = arith.constant 0 : index
    %83 = vector.load %arg4[%c0_84, %c0_85] : memref<128x128xf32, #tpu.memory_space<vmem>>, vector<128x128xf32>
    %cst_86 = arith.constant dense<0.000000e+00> : vector<8x128xf32>
    %84 = tpu.matmul %82, %83, %cst_86 {dimension_numbers = #tpu.dot_dimension_numbers<[1], [0], [0], [1], [0, 0, 1, 1], [], []>} : vector<8x128xf32>, vector<128x128xf32>, vector<8x128xf32> -> vector<8x128xf32>
    %c0_87 = arith.constant 0 : index
    %c0_88 = arith.constant 0 : index
    %85 = vector.load %arg6[%c0_87, %c0_88] : memref<1x128xf32, #tpu.memory_space<vmem>>, vector<1x128xf32>
    %86 = vector.broadcast %85 : vector<1x128xf32> to vector<8x128xf32>
    %87 = arith.addf %84, %86 : vector<8x128xf32>
    %88 = arith.addf %81, %87 : vector<8x128xf32>
    %89 = arith.negf %88 : vector<8x128xf32>
    %90 = math.exp %89 : vector<8x128xf32>
    %cst_89 = arith.constant 1.000000e+00 : f32
    %91 = vector.broadcast %cst_89 : f32 to vector<8x128xf32>
    %92 = arith.addf %91, %90 : vector<8x128xf32>
    %93 = arith.divf %91, %92 : vector<8x128xf32>
    %c96_i32 = arith.constant 96 : i32
    %94 = tpu.dynamic_rotate %93 by %c96_i32 dim 1 : vector<8x128xf32>, i32 -> vector<8x128xf32>
    %c64_i32 = arith.constant 64 : i32
    %95 = tpu.dynamic_rotate %93 by %c64_i32 dim 1 : vector<8x128xf32>, i32 -> vector<8x128xf32>
    %96 = arith.mulf %94, %87 : vector<8x128xf32>
    %97 = arith.addf %81, %96 : vector<8x128xf32>
    %98 = math.tanh %97 : vector<8x128xf32>
    %99 = arith.subf %82, %98 : vector<8x128xf32>
    %100 = arith.mulf %95, %99 : vector<8x128xf32>
    %101 = arith.addf %98, %100 : vector<8x128xf32>
    %c0_90 = arith.constant 0 : index
    %c0_91 = arith.constant 0 : index
    %102 = vector.load %arg7[%c0_90, %c0_91] : memref<128x128xf32, #tpu.memory_space<vmem>>, vector<128x128xf32>
    %cst_92 = arith.constant dense<0.000000e+00> : vector<8x128xf32>
    %103 = tpu.matmul %101, %102, %cst_92 {dimension_numbers = #tpu.dot_dimension_numbers<[1], [0], [0], [1], [0, 0, 1, 1], [], []>} : vector<8x128xf32>, vector<128x128xf32>, vector<8x128xf32> -> vector<8x128xf32>
    %c0_93 = arith.constant 0 : index
    %c0_94 = arith.constant 0 : index
    %104 = vector.load %arg8[%c0_93, %c0_94] : memref<1x128xf32, #tpu.memory_space<vmem>>, vector<1x128xf32>
    %105 = vector.broadcast %104 : vector<1x128xf32> to vector<8x128xf32>
    %106 = arith.addf %103, %105 : vector<8x128xf32>
    %cst_95 = arith.constant 0.000000e+00 : f32
    %107 = vector.broadcast %cst_95 : f32 to vector<8x128xf32>
    %108 = arith.maximumf %106, %107 : vector<8x128xf32>
    %c0_96 = arith.constant 0 : index
    %c0_97 = arith.constant 0 : index
    %109 = vector.load %arg9[%c0_96, %c0_97] : memref<128x128xf32, #tpu.memory_space<vmem>>, vector<128x128xf32>
    %cst_98 = arith.constant dense<0.000000e+00> : vector<8x128xf32>
    %110 = tpu.matmul %108, %109, %cst_98 {dimension_numbers = #tpu.dot_dimension_numbers<[1], [0], [0], [1], [0, 0, 1, 1], [], []>} : vector<8x128xf32>, vector<128x128xf32>, vector<8x128xf32> -> vector<8x128xf32>
    %c0_99 = arith.constant 0 : index
    %c0_100 = arith.constant 0 : index
    %111 = vector.load %arg10[%c0_99, %c0_100] : memref<1x128xf32, #tpu.memory_space<vmem>>, vector<1x128xf32>
    %112 = vector.broadcast %111 : vector<1x128xf32> to vector<8x128xf32>
    %113 = arith.addf %110, %112 : vector<8x128xf32>
    %cst_101 = arith.constant dense<0xFF800000> : vector<8xf32>
    %114 = vector.multi_reduction <maximumf>, %113, %cst_101 [1] : vector<8x128xf32> to vector<8xf32>
    %115 = vector.shape_cast %114 : vector<8xf32> to vector<8x1xf32>
    %116 = vector.broadcast %115 : vector<8x1xf32> to vector<8x128xf32>
    %117 = arith.subf %113, %116 : vector<8x128xf32>
    %118 = math.exp %117 : vector<8x128xf32>
    %cst_102 = arith.constant dense<0.000000e+00> : vector<8xf32>
    %119 = vector.multi_reduction <add>, %118, %cst_102 [1] : vector<8x128xf32> to vector<8xf32>
    %120 = vector.shape_cast %119 : vector<8xf32> to vector<8x1xf32>
    %121 = math.log %120 : vector<8x1xf32>
    %122 = vector.broadcast %121 : vector<8x1xf32> to vector<8x128xf32>
    %123 = arith.subf %117, %122 : vector<8x128xf32>
    %c0_103 = arith.constant 0 : index
    %c0_104 = arith.constant 0 : index
    %124 = vector.load %arg11[%c0_103, %c0_104] : memref<8x128xf32, #tpu.memory_space<vmem>>, vector<8x128xf32>
    tpu.vector_store %arg11[%c0_103, %c0_104], %123 {strides = array<i32>} : memref<8x128xf32, #tpu.memory_space<vmem>>, vector<8x128xf32>,
    %c1_i32 = arith.constant 1 : i32
    %125 = arith.index_cast %c1_i32 : i32 to index
    %c0_105 = arith.constant 0 : index
    %c0_106 = arith.constant 0 : index
    %126 = vector.load %arg13[%125, %c0_105, %c0_106] : memref<8x8x128xf32, #tpu.memory_space<vmem>>, vector<1x8x128xf32>
    %127 = vector.shape_cast %126 : vector<1x8x128xf32> to vector<8x128xf32>
    %c0_107 = arith.constant 0 : index
    %c0_108 = arith.constant 0 : index
    %128 = vector.load %arg4[%c0_107, %c0_108] : memref<128x128xf32, #tpu.memory_space<vmem>>, vector<128x128xf32>
    %cst_109 = arith.constant dense<0.000000e+00> : vector<8x128xf32>
    %129 = tpu.matmul %101, %128, %cst_109 {dimension_numbers = #tpu.dot_dimension_numbers<[1], [0], [0], [1], [0, 0, 1, 1], [], []>} : vector<8x128xf32>, vector<128x128xf32>, vector<8x128xf32> -> vector<8x128xf32>
    %c0_110 = arith.constant 0 : index
    %c0_111 = arith.constant 0 : index
    %130 = vector.load %arg6[%c0_110, %c0_111] : memref<1x128xf32, #tpu.memory_space<vmem>>, vector<1x128xf32>
    %131 = vector.broadcast %130 : vector<1x128xf32> to vector<8x128xf32>
    %132 = arith.addf %129, %131 : vector<8x128xf32>
    %133 = arith.addf %127, %132 : vector<8x128xf32>
    %134 = arith.negf %133 : vector<8x128xf32>
    %135 = math.exp %134 : vector<8x128xf32>
    %cst_112 = arith.constant 1.000000e+00 : f32
    %136 = vector.broadcast %cst_112 : f32 to vector<8x128xf32>
    %137 = arith.addf %136, %135 : vector<8x128xf32>
    %138 = arith.divf %136, %137 : vector<8x128xf32>
    %c96_i32_113 = arith.constant 96 : i32
    %139 = tpu.dynamic_rotate %138 by %c96_i32_113 dim 1 : vector<8x128xf32>, i32 -> vector<8x128xf32>
    %c64_i32_114 = arith.constant 64 : i32
    %140 = tpu.dynamic_rotate %138 by %c64_i32_114 dim 1 : vector<8x128xf32>, i32 -> vector<8x128xf32>
    %141 = arith.mulf %139, %132 : vector<8x128xf32>
    %142 = arith.addf %127, %141 : vector<8x128xf32>
    %143 = math.tanh %142 : vector<8x128xf32>
    %144 = arith.subf %101, %143 : vector<8x128xf32>
    %145 = arith.mulf %140, %144 : vector<8x128xf32>
    %146 = arith.addf %143, %145 : vector<8x128xf32>
    %c2_i32 = arith.constant 2 : i32
    %147 = arith.index_cast %c2_i32 : i32 to index
    %c0_115 = arith.constant 0 : index
    %c0_116 = arith.constant 0 : index
    %148 = vector.load %arg13[%147, %c0_115, %c0_116] : memref<8x8x128xf32, #tpu.memory_space<vmem>>, vector<1x8x128xf32>
    %149 = vector.shape_cast %148 : vector<1x8x128xf32> to vector<8x128xf32>
    %c0_117 = arith.constant 0 : index
    %c0_118 = arith.constant 0 : index
    %150 = vector.load %arg4[%c0_117, %c0_118] : memref<128x128xf32, #tpu.memory_space<vmem>>, vector<128x128xf32>
    %cst_119 = arith.constant dense<0.000000e+00> : vector<8x128xf32>
    %151 = tpu.matmul %146, %150, %cst_119 {dimension_numbers = #tpu.dot_dimension_numbers<[1], [0], [0], [1], [0, 0, 1, 1], [], []>} : vector<8x128xf32>, vector<128x128xf32>, vector<8x128xf32> -> vector<8x128xf32>
    %c0_120 = arith.constant 0 : index
    %c0_121 = arith.constant 0 : index
    %152 = vector.load %arg6[%c0_120, %c0_121] : memref<1x128xf32, #tpu.memory_space<vmem>>, vector<1x128xf32>
    %153 = vector.broadcast %152 : vector<1x128xf32> to vector<8x128xf32>
    %154 = arith.addf %151, %153 : vector<8x128xf32>
    %155 = arith.addf %149, %154 : vector<8x128xf32>
    %156 = arith.negf %155 : vector<8x128xf32>
    %157 = math.exp %156 : vector<8x128xf32>
    %cst_122 = arith.constant 1.000000e+00 : f32
    %158 = vector.broadcast %cst_122 : f32 to vector<8x128xf32>
    %159 = arith.addf %158, %157 : vector<8x128xf32>
    %160 = arith.divf %158, %159 : vector<8x128xf32>
    %c96_i32_123 = arith.constant 96 : i32
    %161 = tpu.dynamic_rotate %160 by %c96_i32_123 dim 1 : vector<8x128xf32>, i32 -> vector<8x128xf32>
    %c64_i32_124 = arith.constant 64 : i32
    %162 = tpu.dynamic_rotate %160 by %c64_i32_124 dim 1 : vector<8x128xf32>, i32 -> vector<8x128xf32>
    %163 = arith.mulf %161, %154 : vector<8x128xf32>
    %164 = arith.addf %149, %163 : vector<8x128xf32>
    %165 = math.tanh %164 : vector<8x128xf32>
    %166 = arith.subf %146, %165 : vector<8x128xf32>
    %167 = arith.mulf %162, %166 : vector<8x128xf32>
    %168 = arith.addf %165, %167 : vector<8x128xf32>
    %c3_i32 = arith.constant 3 : i32
    %169 = arith.index_cast %c3_i32 : i32 to index
    %c0_125 = arith.constant 0 : index
    %c0_126 = arith.constant 0 : index
    %170 = vector.load %arg13[%169, %c0_125, %c0_126] : memref<8x8x128xf32, #tpu.memory_space<vmem>>, vector<1x8x128xf32>
    %171 = vector.shape_cast %170 : vector<1x8x128xf32> to vector<8x128xf32>
    %c0_127 = arith.constant 0 : index
    %c0_128 = arith.constant 0 : index
    %172 = vector.load %arg4[%c0_127, %c0_128] : memref<128x128xf32, #tpu.memory_space<vmem>>, vector<128x128xf32>
    %cst_129 = arith.constant dense<0.000000e+00> : vector<8x128xf32>
    %173 = tpu.matmul %168, %172, %cst_129 {dimension_numbers = #tpu.dot_dimension_numbers<[1], [0], [0], [1], [0, 0, 1, 1], [], []>} : vector<8x128xf32>, vector<128x128xf32>, vector<8x128xf32> -> vector<8x128xf32>
    %c0_130 = arith.constant 0 : index
    %c0_131 = arith.constant 0 : index
    %174 = vector.load %arg6[%c0_130, %c0_131] : memref<1x128xf32, #tpu.memory_space<vmem>>, vector<1x128xf32>
    %175 = vector.broadcast %174 : vector<1x128xf32> to vector<8x128xf32>
    %176 = arith.addf %173, %175 : vector<8x128xf32>
    %177 = arith.addf %171, %176 : vector<8x128xf32>
    %178 = arith.negf %177 : vector<8x128xf32>
    %179 = math.exp %178 : vector<8x128xf32>
    %cst_132 = arith.constant 1.000000e+00 : f32
    %180 = vector.broadcast %cst_132 : f32 to vector<8x128xf32>
    %181 = arith.addf %180, %179 : vector<8x128xf32>
    %182 = arith.divf %180, %181 : vector<8x128xf32>
    %c96_i32_133 = arith.constant 96 : i32
    %183 = tpu.dynamic_rotate %182 by %c96_i32_133 dim 1 : vector<8x128xf32>, i32 -> vector<8x128xf32>
    %c64_i32_134 = arith.constant 64 : i32
    %184 = tpu.dynamic_rotate %182 by %c64_i32_134 dim 1 : vector<8x128xf32>, i32 -> vector<8x128xf32>
    %185 = arith.mulf %183, %176 : vector<8x128xf32>
    %186 = arith.addf %171, %185 : vector<8x128xf32>
    %187 = math.tanh %186 : vector<8x128xf32>
    %188 = arith.subf %168, %187 : vector<8x128xf32>
    %189 = arith.mulf %184, %188 : vector<8x128xf32>
    %190 = arith.addf %187, %189 : vector<8x128xf32>
    %c4_i32 = arith.constant 4 : i32
    %191 = arith.index_cast %c4_i32 : i32 to index
    %c0_135 = arith.constant 0 : index
    %c0_136 = arith.constant 0 : index
    %192 = vector.load %arg13[%191, %c0_135, %c0_136] : memref<8x8x128xf32, #tpu.memory_space<vmem>>, vector<1x8x128xf32>
    %193 = vector.shape_cast %192 : vector<1x8x128xf32> to vector<8x128xf32>
    %c0_137 = arith.constant 0 : index
    %c0_138 = arith.constant 0 : index
    %194 = vector.load %arg4[%c0_137, %c0_138] : memref<128x128xf32, #tpu.memory_space<vmem>>, vector<128x128xf32>
    %cst_139 = arith.constant dense<0.000000e+00> : vector<8x128xf32>
    %195 = tpu.matmul %190, %194, %cst_139 {dimension_numbers = #tpu.dot_dimension_numbers<[1], [0], [0], [1], [0, 0, 1, 1], [], []>} : vector<8x128xf32>, vector<128x128xf32>, vector<8x128xf32> -> vector<8x128xf32>
    %c0_140 = arith.constant 0 : index
    %c0_141 = arith.constant 0 : index
    %196 = vector.load %arg6[%c0_140, %c0_141] : memref<1x128xf32, #tpu.memory_space<vmem>>, vector<1x128xf32>
    %197 = vector.broadcast %196 : vector<1x128xf32> to vector<8x128xf32>
    %198 = arith.addf %195, %197 : vector<8x128xf32>
    %199 = arith.addf %193, %198 : vector<8x128xf32>
    %200 = arith.negf %199 : vector<8x128xf32>
    %201 = math.exp %200 : vector<8x128xf32>
    %cst_142 = arith.constant 1.000000e+00 : f32
    %202 = vector.broadcast %cst_142 : f32 to vector<8x128xf32>
    %203 = arith.addf %202, %201 : vector<8x128xf32>
    %204 = arith.divf %202, %203 : vector<8x128xf32>
    %c96_i32_143 = arith.constant 96 : i32
    %205 = tpu.dynamic_rotate %204 by %c96_i32_143 dim 1 : vector<8x128xf32>, i32 -> vector<8x128xf32>
    %c64_i32_144 = arith.constant 64 : i32
    %206 = tpu.dynamic_rotate %204 by %c64_i32_144 dim 1 : vector<8x128xf32>, i32 -> vector<8x128xf32>
    %207 = arith.mulf %205, %198 : vector<8x128xf32>
    %208 = arith.addf %193, %207 : vector<8x128xf32>
    %209 = math.tanh %208 : vector<8x128xf32>
    %210 = arith.subf %190, %209 : vector<8x128xf32>
    %211 = arith.mulf %206, %210 : vector<8x128xf32>
    %212 = arith.addf %209, %211 : vector<8x128xf32>
    %c5_i32 = arith.constant 5 : i32
    %213 = arith.index_cast %c5_i32 : i32 to index
    %c0_145 = arith.constant 0 : index
    %c0_146 = arith.constant 0 : index
    %214 = vector.load %arg13[%213, %c0_145, %c0_146] : memref<8x8x128xf32, #tpu.memory_space<vmem>>, vector<1x8x128xf32>
    %215 = vector.shape_cast %214 : vector<1x8x128xf32> to vector<8x128xf32>
    %c0_147 = arith.constant 0 : index
    %c0_148 = arith.constant 0 : index
    %216 = vector.load %arg4[%c0_147, %c0_148] : memref<128x128xf32, #tpu.memory_space<vmem>>, vector<128x128xf32>
    %cst_149 = arith.constant dense<0.000000e+00> : vector<8x128xf32>
    %217 = tpu.matmul %212, %216, %cst_149 {dimension_numbers = #tpu.dot_dimension_numbers<[1], [0], [0], [1], [0, 0, 1, 1], [], []>} : vector<8x128xf32>, vector<128x128xf32>, vector<8x128xf32> -> vector<8x128xf32>
    %c0_150 = arith.constant 0 : index
    %c0_151 = arith.constant 0 : index
    %218 = vector.load %arg6[%c0_150, %c0_151] : memref<1x128xf32, #tpu.memory_space<vmem>>, vector<1x128xf32>
    %219 = vector.broadcast %218 : vector<1x128xf32> to vector<8x128xf32>
    %220 = arith.addf %217, %219 : vector<8x128xf32>
    %221 = arith.addf %215, %220 : vector<8x128xf32>
    %222 = arith.negf %221 : vector<8x128xf32>
    %223 = math.exp %222 : vector<8x128xf32>
    %cst_152 = arith.constant 1.000000e+00 : f32
    %224 = vector.broadcast %cst_152 : f32 to vector<8x128xf32>
    %225 = arith.addf %224, %223 : vector<8x128xf32>
    %226 = arith.divf %224, %225 : vector<8x128xf32>
    %c96_i32_153 = arith.constant 96 : i32
    %227 = tpu.dynamic_rotate %226 by %c96_i32_153 dim 1 : vector<8x128xf32>, i32 -> vector<8x128xf32>
    %c64_i32_154 = arith.constant 64 : i32
    %228 = tpu.dynamic_rotate %226 by %c64_i32_154 dim 1 : vector<8x128xf32>, i32 -> vector<8x128xf32>
    %229 = arith.mulf %227, %220 : vector<8x128xf32>
    %230 = arith.addf %215, %229 : vector<8x128xf32>
    %231 = math.tanh %230 : vector<8x128xf32>
    %232 = arith.subf %212, %231 : vector<8x128xf32>
    %233 = arith.mulf %228, %232 : vector<8x128xf32>
    %234 = arith.addf %231, %233 : vector<8x128xf32>
    %c6_i32 = arith.constant 6 : i32
    %235 = arith.index_cast %c6_i32 : i32 to index
    %c0_155 = arith.constant 0 : index
    %c0_156 = arith.constant 0 : index
    %236 = vector.load %arg13[%235, %c0_155, %c0_156] : memref<8x8x128xf32, #tpu.memory_space<vmem>>, vector<1x8x128xf32>
    %237 = vector.shape_cast %236 : vector<1x8x128xf32> to vector<8x128xf32>
    %c0_157 = arith.constant 0 : index
    %c0_158 = arith.constant 0 : index
    %238 = vector.load %arg4[%c0_157, %c0_158] : memref<128x128xf32, #tpu.memory_space<vmem>>, vector<128x128xf32>
    %cst_159 = arith.constant dense<0.000000e+00> : vector<8x128xf32>
    %239 = tpu.matmul %234, %238, %cst_159 {dimension_numbers = #tpu.dot_dimension_numbers<[1], [0], [0], [1], [0, 0, 1, 1], [], []>} : vector<8x128xf32>, vector<128x128xf32>, vector<8x128xf32> -> vector<8x128xf32>
    %c0_160 = arith.constant 0 : index
    %c0_161 = arith.constant 0 : index
    %240 = vector.load %arg6[%c0_160, %c0_161] : memref<1x128xf32, #tpu.memory_space<vmem>>, vector<1x128xf32>
    %241 = vector.broadcast %240 : vector<1x128xf32> to vector<8x128xf32>
    %242 = arith.addf %239, %241 : vector<8x128xf32>
    %243 = arith.addf %237, %242 : vector<8x128xf32>
    %244 = arith.negf %243 : vector<8x128xf32>
    %245 = math.exp %244 : vector<8x128xf32>
    %cst_162 = arith.constant 1.000000e+00 : f32
    %246 = vector.broadcast %cst_162 : f32 to vector<8x128xf32>
    %247 = arith.addf %246, %245 : vector<8x128xf32>
    %248 = arith.divf %246, %247 : vector<8x128xf32>
    %c96_i32_163 = arith.constant 96 : i32
    %249 = tpu.dynamic_rotate %248 by %c96_i32_163 dim 1 : vector<8x128xf32>, i32 -> vector<8x128xf32>
    %c64_i32_164 = arith.constant 64 : i32
    %250 = tpu.dynamic_rotate %248 by %c64_i32_164 dim 1 : vector<8x128xf32>, i32 -> vector<8x128xf32>
    %251 = arith.mulf %249, %242 : vector<8x128xf32>
    %252 = arith.addf %237, %251 : vector<8x128xf32>
    %253 = math.tanh %252 : vector<8x128xf32>
    %254 = arith.subf %234, %253 : vector<8x128xf32>
    %255 = arith.mulf %250, %254 : vector<8x128xf32>
    %256 = arith.addf %253, %255 : vector<8x128xf32>
    %c7_i32 = arith.constant 7 : i32
    %257 = arith.index_cast %c7_i32 : i32 to index
    %c0_165 = arith.constant 0 : index
    %c0_166 = arith.constant 0 : index
    %258 = vector.load %arg13[%257, %c0_165, %c0_166] : memref<8x8x128xf32, #tpu.memory_space<vmem>>, vector<1x8x128xf32>
    %259 = vector.shape_cast %258 : vector<1x8x128xf32> to vector<8x128xf32>
    %c0_167 = arith.constant 0 : index
    %c0_168 = arith.constant 0 : index
    %260 = vector.load %arg4[%c0_167, %c0_168] : memref<128x128xf32, #tpu.memory_space<vmem>>, vector<128x128xf32>
    %cst_169 = arith.constant dense<0.000000e+00> : vector<8x128xf32>
    %261 = tpu.matmul %256, %260, %cst_169 {dimension_numbers = #tpu.dot_dimension_numbers<[1], [0], [0], [1], [0, 0, 1, 1], [], []>} : vector<8x128xf32>, vector<128x128xf32>, vector<8x128xf32> -> vector<8x128xf32>
    %c0_170 = arith.constant 0 : index
    %c0_171 = arith.constant 0 : index
    %262 = vector.load %arg6[%c0_170, %c0_171] : memref<1x128xf32, #tpu.memory_space<vmem>>, vector<1x128xf32>
    %263 = vector.broadcast %262 : vector<1x128xf32> to vector<8x128xf32>
    %264 = arith.addf %261, %263 : vector<8x128xf32>
    %265 = arith.addf %259, %264 : vector<8x128xf32>
    %266 = arith.negf %265 : vector<8x128xf32>
    %267 = math.exp %266 : vector<8x128xf32>
    %cst_172 = arith.constant 1.000000e+00 : f32
    %268 = vector.broadcast %cst_172 : f32 to vector<8x128xf32>
    %269 = arith.addf %268, %267 : vector<8x128xf32>
    %270 = arith.divf %268, %269 : vector<8x128xf32>
    %c96_i32_173 = arith.constant 96 : i32
    %271 = tpu.dynamic_rotate %270 by %c96_i32_173 dim 1 : vector<8x128xf32>, i32 -> vector<8x128xf32>
    %c64_i32_174 = arith.constant 64 : i32
    %272 = tpu.dynamic_rotate %270 by %c64_i32_174 dim 1 : vector<8x128xf32>, i32 -> vector<8x128xf32>
    %273 = arith.mulf %271, %264 : vector<8x128xf32>
    %274 = arith.addf %259, %273 : vector<8x128xf32>
    %275 = math.tanh %274 : vector<8x128xf32>
    %276 = arith.subf %256, %275 : vector<8x128xf32>
    %277 = arith.mulf %272, %276 : vector<8x128xf32>
    %278 = arith.addf %275, %277 : vector<8x128xf32>
    %c7_i32_175 = arith.constant 7 : i32
    %c0_176 = arith.constant 0 : index
    %c0_177 = arith.constant 0 : index
    %279 = vector.load %arg12[%c0_176, %c0_177] : memref<8x128xf32, #tpu.memory_space<vmem>>, vector<8x128xf32>
    tpu.vector_store %arg12[%c0_176, %c0_177], %278 {strides = array<i32>} : memref<8x128xf32, #tpu.memory_space<vmem>>, vector<8x128xf32>,
    return
  }
  func.func @transform_0(%arg0: i32) -> (i32, i32, i32) {
    %c0_i32 = arith.constant 0 : i32
    %c0_i32_0 = arith.constant 0 : i32
    %c0_i32_1 = arith.constant 0 : i32
    return %c0_i32, %arg0, %c0_i32_0 : i32, i32, i32
  }
  func.func @transform_1(%arg0: i32) -> (i32, i32) {
    %c0_i32 = arith.constant 0 : i32
    %c0_i32_0 = arith.constant 0 : i32
    return %arg0, %c0_i32 : i32, i32
  }
  func.func @transform_2(%arg0: i32) -> (i32, i32) {
    %c0_i32 = arith.constant 0 : i32
    %c0_i32_0 = arith.constant 0 : i32
    %c0_i32_1 = arith.constant 0 : i32
    return %c0_i32, %c0_i32_0 : i32, i32
  }
  func.func @transform_3(%arg0: i32) -> (i32, i32) {
    %c0_i32 = arith.constant 0 : i32
    %c0_i32_0 = arith.constant 0 : i32
    %c0_i32_1 = arith.constant 0 : i32
    return %c0_i32, %c0_i32_0 : i32, i32
  }
  func.func @transform_4(%arg0: i32) -> (i32, i32) {
    %c0_i32 = arith.constant 0 : i32
    %c0_i32_0 = arith.constant 0 : i32
    %c0_i32_1 = arith.constant 0 : i32
    return %c0_i32, %c0_i32_0 : i32, i32
  }
  func.func @transform_5(%arg0: i32) -> (i32, i32) {
    %c0_i32 = arith.constant 0 : i32
    %c0_i32_0 = arith.constant 0 : i32
    %c0_i32_1 = arith.constant 0 : i32
    return %c0_i32, %c0_i32_0 : i32, i32
  }
  func.func @transform_6(%arg0: i32) -> (i32, i32) {
    %c0_i32 = arith.constant 0 : i32
    %c0_i32_0 = arith.constant 0 : i32
    %c0_i32_1 = arith.constant 0 : i32
    return %c0_i32, %c0_i32_0 : i32, i32
  }
  func.func @transform_7(%arg0: i32) -> (i32, i32) {
    %c0_i32 = arith.constant 0 : i32
    %c0_i32_0 = arith.constant 0 : i32
    %c0_i32_1 = arith.constant 0 : i32
    return %c0_i32, %c0_i32_0 : i32, i32
  }
  func.func @transform_8(%arg0: i32) -> (i32, i32) {
    %c0_i32 = arith.constant 0 : i32
    %c0_i32_0 = arith.constant 0 : i32
    %c0_i32_1 = arith.constant 0 : i32
    return %c0_i32, %c0_i32_0 : i32, i32
  }
  func.func @transform_9(%arg0: i32) -> (i32, i32) {
    %c0_i32 = arith.constant 0 : i32
    %c0_i32_0 = arith.constant 0 : i32
    %c0_i32_1 = arith.constant 0 : i32
    return %c0_i32, %c0_i32_0 : i32, i32
  }
  func.func @transform_10(%arg0: i32) -> (i32, i32) {
    %c0_i32 = arith.constant 0 : i32
    %c0_i32_0 = arith.constant 0 : i32
    return %arg0, %c0_i32 : i32, i32
  }
  func.func @transform_11(%arg0: i32) -> (i32, i32) {
    %c0_i32 = arith.constant 0 : i32
    %c0_i32_0 = arith.constant 0 : i32
    return %arg0, %c0_i32 : i32, i32
  }
}

</mosaic_0001>

<llo_original>
// kernel: decoder_rnn_forward.1
$region0: #{decoder_rnn_forward.1}
  #allocation0 [shape = 'u32[]', space=smem, size = 0x4, offset = 0x4, fixed_abs, tag = 'smem constant byte address 0x4 - core index']
  #allocation1 [shape = 'u32[144,128]{1,0:T(1,128)}', space=vmem, size = 0x12000, scoped, tag = 'internal scratch']
  #allocation2 [shape = 'f32[8,8,128]{2,1,0:T(8,128)}', space=vmem, size = 0x8000, scoped, tag = 'scratch operand']
  %s0 = inlined_call_operand.hbm [shape: f32[8,8,16], index: 0, kind: input, shape index: {}]
  %s1 = inlined_call_operand.vmem [shape: f32[8,128], index: 1, kind: input, shape index: {}]
  %s2 = inlined_call_operand.vmem [shape: f32[16,128], index: 2, kind: input, shape index: {}]
  %s3 = inlined_call_operand.hbm [shape: f32[128,128], index: 3, kind: input, shape index: {}]
  %s4 = inlined_call_operand.vmem [shape: f32[1,128], index: 4, kind: input, shape index: {}]
  %s5 = inlined_call_operand.vmem [shape: f32[1,128], index: 5, kind: input, shape index: {}]
  %s6 = inlined_call_operand.hbm [shape: f32[128,128], index: 6, kind: input, shape index: {}]
  %s7 = inlined_call_operand.vmem [shape: f32[1,128], index: 7, kind: input, shape index: {}]
  %s8 = inlined_call_operand.hbm [shape: f32[128,128], index: 8, kind: input, shape index: {}]
  %s9 = inlined_call_operand.vmem [shape: f32[1,128], index: 9, kind: input, shape index: {}]
  %s10 = inlined_call_operand.hbm [shape: f32[8,128], index: 10, kind: output, shape index: {0}]
  %s11 = inlined_call_operand.vmem [shape: f32[8,128], index: 11, kind: output, shape index: {1}]
  %12 = xla_tuple %s10, %s11
  %s13 = sld [smem:[#allocation0]]
  $region74: #{decoder_rnn_forward.1} parent=0
    _
  %s15 = ssub.s32 1, %s13
  %s16 = scalar_select 0, %s15, %s13
  $region1: #{decoder_rnn_forward.1} parent=0
    #allocation3 [shape = 'u8[32768]{0}', space=vmem, size = 0x8000, scoped, tag = 'input window, operand 0, single buffered']
    #allocation4 [shape = 's32[1]{0}', space=sflag, size = 0x4, scoped, tag = 'scoped memory for decoder_rnn_forward.1']
    #allocation5 [shape = 's32[1]{0}', space=sflag, size = 0x4, scoped, tag = 'scoped memory for decoder_rnn_forward.1']
    #allocation6 [shape = 'u8[65536]{0}', space=vmem, size = 0x10000, scoped, tag = 'input window, operand 3, single buffered']
    #allocation7 [shape = 's32[1]{0}', space=sflag, size = 0x4, scoped, tag = 'scoped memory for decoder_rnn_forward.1']
    #allocation8 [shape = 'u8[65536]{0}', space=vmem, size = 0x10000, scoped, tag = 'input window, operand 6, single buffered']
    #allocation9 [shape = 'u8[65536]{0}', space=vmem, size = 0x10000, scoped, tag = 'input window, operand 8, single buffered']
    #allocation10 [shape = 's32[1]{0}', space=sflag, size = 0x4, scoped, tag = 'scoped memory for decoder_rnn_forward.1']
    #allocation11 [shape = 'u8[4096]{0}', space=vmem, size = 0x1000, scoped, tag = 'output window, operand 0, single buffered']
    %17 = vsyncpa [#allocation4], 0
    %18 = vsyncpa [#allocation7], 0
    %19 = vsyncpa [#allocation10], 0
    %20 = vsyncpa [#allocation5], 0
    // Predicated region
    $region2: #{decoder_rnn_forward.1} parent=1 // pred_check
      _
    $region3: #{decoder_rnn_forward.1} parent=1 // pred_check_branch
      %22 = sbr.rel (0) target = $region5
    $region4: #{decoder_rnn_forward.1} parent=1 // pred_region
      %s24 = ssub.s32 1024, 1024
      %25 = vsyncadd [#allocation4], %s24
      %s26 = sshll.u32 [#allocation3], 4
      %s27 = int_to_ptr.vmem [resolvable:$true] %s26
      %32 = dma.hbm_to_vmem [thread:$0]  %s0, 1024, %s27, [#allocation4], 128, 128, 8
    $region5: #{decoder_rnn_forward.1} parent=1 // pred_fallthru
      _
    // Predicated region
    $region6: #{decoder_rnn_forward.1} parent=1 // pred_check
      _
    $region7: #{decoder_rnn_forward.1} parent=1 // pred_check_branch
      %34 = sbr.rel (0) target = $region9
    $region8: #{decoder_rnn_forward.1} parent=1 // pred_region
      _
    $region9: #{decoder_rnn_forward.1} parent=1 // pred_fallthru
      _
    // Predicated region
    $region10: #{decoder_rnn_forward.1} parent=1 // pred_check
      _
    $region11: #{decoder_rnn_forward.1} parent=1 // pred_check_branch
      %36 = sbr.rel (0) target = $region13
    $region12: #{decoder_rnn_forward.1} parent=1 // pred_region
      _
    $region13: #{decoder_rnn_forward.1} parent=1 // pred_fallthru
      _
    // Predicated region
    $region14: #{decoder_rnn_forward.1} parent=1 // pred_check
      _
    $region15: #{decoder_rnn_forward.1} parent=1 // pred_check_branch
      %38 = sbr.rel (0) target = $region17
    $region16: #{decoder_rnn_forward.1} parent=1 // pred_region
      %s40 = ssub.s32 2048, 2048
      %41 = vsyncadd [#allocation7], %s40
      %s42 = sshll.u32 [#allocation6], 4
      %s43 = int_to_ptr.vmem [resolvable:$true] %s42
      %48 = dma.hbm_to_vmem [thread:$0]  %s3, 2048, %s43, [#allocation7], 128, 128, 8
    $region17: #{decoder_rnn_forward.1} parent=1 // pred_fallthru
      _
    // Predicated region
    $region18: #{decoder_rnn_forward.1} parent=1 // pred_check
      _
    $region19: #{decoder_rnn_forward.1} parent=1 // pred_check_branch
      %50 = sbr.rel (0) target = $region21
    $region20: #{decoder_rnn_forward.1} parent=1 // pred_region
      _
    $region21: #{decoder_rnn_forward.1} parent=1 // pred_fallthru
      _
    // Predicated region
    $region22: #{decoder_rnn_forward.1} parent=1 // pred_check
      _
    $region23: #{decoder_rnn_forward.1} parent=1 // pred_check_branch
      %52 = sbr.rel (0) target = $region25
    $region24: #{decoder_rnn_forward.1} parent=1 // pred_region
      _
    $region25: #{decoder_rnn_forward.1} parent=1 // pred_fallthru
      _
    // Predicated region
    $region26: #{decoder_rnn_forward.1} parent=1 // pred_check
      _
    $region27: #{decoder_rnn_forward.1} parent=1 // pred_check_branch
      %54 = sbr.rel (0) target = $region29
    $region28: #{decoder_rnn_forward.1} parent=1 // pred_region
      %s56 = ssub.s32 2048, 2048
      %57 = vsyncadd [#allocation7], %s56
      %s58 = sshll.u32 [#allocation8], 4
      %s59 = int_to_ptr.vmem [resolvable:$true] %s58
      %64 = dma.hbm_to_vmem [thread:$0]  %s6, 2048, %s59, [#allocation7], 128, 128, 8
    $region29: #{decoder_rnn_forward.1} parent=1 // pred_fallthru
      _
    // Predicated region
    $region30: #{decoder_rnn_forward.1} parent=1 // pred_check
      _
    $region31: #{decoder_rnn_forward.1} parent=1 // pred_check_branch
      %66 = sbr.rel (0) target = $region33
    $region32: #{decoder_rnn_forward.1} parent=1 // pred_region
      _
    $region33: #{decoder_rnn_forward.1} parent=1 // pred_fallthru
      _
    // Predicated region
    $region34: #{decoder_rnn_forward.1} parent=1 // pred_check
      _
    $region35: #{decoder_rnn_forward.1} parent=1 // pred_check_branch
      %68 = sbr.rel (0) target = $region37
    $region36: #{decoder_rnn_forward.1} parent=1 // pred_region
      %s70 = ssub.s32 2048, 2048
      %71 = vsyncadd [#allocation10], %s70
      %s72 = sshll.u32 [#allocation9], 4
      %s73 = int_to_ptr.vmem [resolvable:$true] %s72
      %78 = dma.hbm_to_vmem [thread:$0]  %s8, 2048, %s73, [#allocation10], 128, 128, 8
    $region37: #{decoder_rnn_forward.1} parent=1 // pred_fallthru
      _
    // Predicated region
    $region38: #{decoder_rnn_forward.1} parent=1 // pred_check
      _
    $region39: #{decoder_rnn_forward.1} parent=1 // pred_check_branch
      %80 = sbr.rel (0) target = $region41
    $region40: #{decoder_rnn_forward.1} parent=1 // pred_region
      _
    $region41: #{decoder_rnn_forward.1} parent=1 // pred_fallthru
      _
    // Predicated region
    $region42: #{decoder_rnn_forward.1} parent=1 // pred_check
      _
    $region43: #{decoder_rnn_forward.1} parent=1 // pred_check_branch
      %82 = sbr.rel (0) target = $region45
    $region44: #{decoder_rnn_forward.1} parent=1 // pred_region
      %83 = dma.done [#allocation4], 1024
    $region45: #{decoder_rnn_forward.1} parent=1 // pred_fallthru
      _
    // Predicated region
    $region46: #{decoder_rnn_forward.1} parent=1 // pred_check
      _
    $region47: #{decoder_rnn_forward.1} parent=1 // pred_check_branch
      %85 = sbr.rel (0) target = $region49
    $region48: #{decoder_rnn_forward.1} parent=1 // pred_region
      %86 = dma.done [#allocation7], 2048
    $region49: #{decoder_rnn_forward.1} parent=1 // pred_fallthru
      _
    // Predicated region
    $region50: #{decoder_rnn_forward.1} parent=1 // pred_check
      _
    $region51: #{decoder_rnn_forward.1} parent=1 // pred_check_branch
      %88 = sbr.rel (0) target = $region53
    $region52: #{decoder_rnn_forward.1} parent=1 // pred_region
      %89 = dma.done [#allocation7], 2048
    $region53: #{decoder_rnn_forward.1} parent=1 // pred_fallthru
      _
    // Predicated region
    $region54: #{decoder_rnn_forward.1} parent=1 // pred_check
      _
    $region55: #{decoder_rnn_forward.1} parent=1 // pred_check_branch
      %91 = sbr.rel (0) target = $region57
    $region56: #{decoder_rnn_forward.1} parent=1 // pred_region
      %92 = dma.done [#allocation10], 2048
    $region57: #{decoder_rnn_forward.1} parent=1 // pred_fallthru
      _
    %v93 = vld [vmem:[#allocation3] sm:$0xff]
    %v94 = vld [vmem:[%s2] sm:$0xff]
    %v95 = vld [vmem:[%s2 + $0x8] sm:$0xff]
    %v96 = vld [vmem:[%s4] sm:$0x1]
    %v98 = vlaneseq
    %v99 = vshrl.u32 %v98, 7
    %v100 = vsub.s32 0, %v99
    %v101 = vrot.slane %v96, %v100
    %vm103 = vcmask 130048
    %v105 = vsel %vm103, %v93, 0
    %107 = vmatprep.subr.mxu0 0.0
    %108 = vmatpush1.msra.mxu0 %v94
    %109 = vmatprep.subr.mxu0 0.0
    %110 = vmatpush1.msra.mxu0 %v95
    %111 = vmatprep.subr.mxu0 0.0
    %112 = vmatpush1.msra.mxu0 0.0
    %113 = vmatprep.subr.mxu0 0.0
    %114 = vmatpush1.msra.mxu0 0.0
    %115 = vmatprep.subr.mxu0 0.0
    %116 = vmatpush1.msra.mxu0 0.0
    %117 = vmatprep.subr.mxu0 0.0
    %118 = vmatpush1.msra.mxu0 0.0
    %119 = vmatprep.subr.mxu0 0.0
    %120 = vmatpush1.msra.mxu0 0.0
    %121 = vmatprep.subr.mxu0 0.0
    %122 = vmatpush1.msra.mxu0 0.0
    %123 = vmatprep.subr.mxu0 0.0
    %124 = vmatpush1.msra.mxu0 0.0
    %125 = vmatprep.subr.mxu0 0.0
    %126 = vmatpush1.msra.mxu0 0.0
    %127 = vmatprep.subr.mxu0 0.0
    %128 = vmatpush1.msra.mxu0 0.0
    %129 = vmatprep.subr.mxu0 0.0
    %130 = vmatpush1.msra.mxu0 0.0
    %131 = vmatprep.subr.mxu0 0.0
    %132 = vmatpush1.msra.mxu0 0.0
    %133 = vmatprep.subr.mxu0 0.0
    %134 = vmatpush1.msra.mxu0 0.0
    %135 = vmatprep.subr.mxu0 0.0
    %136 = vmatpush1.msra.mxu0 0.0
    %137 = vmatprep.subr.mxu0 0.0
    %138 = vmatpush1.msra.mxu0 0.0
    %139 = vmatprep.subr.mxu0 0.0
    %140 = vmatpush1.msra.mxu0 0.0
    %141 = vmatprep.subr.mxu0 0.0
    %142 = vmatpush1.msra.mxu0 0.0
    %143 = vmatprep.subr.mxu0 0.0
    %144 = vmatpush1.msra.mxu0 0.0
    %145 = vmatprep.subr.mxu0 0.0
    %146 = vmatpush1.msra.mxu0 0.0
    %147 = vmatprep.subr.mxu0 0.0
    %148 = vmatpush1.msra.mxu0 0.0
    %149 = vmatprep.subr.mxu0 0.0
    %150 = vmatpush1.msra.mxu0 0.0
    %151 = vmatprep.subr.mxu0 0.0
    %152 = vmatpush1.msra.mxu0 0.0
    %153 = vmatprep.subr.mxu0 0.0
    %154 = vmatpush1.msra.mxu0 0.0
    %155 = vmatprep.subr.mxu0 0.0
    %156 = vmatpush1.msra.mxu0 0.0
    %157 = vmatprep.subr.mxu0 0.0
    %158 = vmatpush1.msra.mxu0 0.0
    %159 = vmatprep.subr.mxu0 0.0
    %160 = vmatpush1.msra.mxu0 0.0
    %161 = vmatprep.subr.mxu0 0.0
    %162 = vmatpush1.msra.mxu0 0.0
    %163 = vmatprep.subr.mxu0 0.0
    %164 = vmatpush1.msra.mxu0 0.0
    %165 = vmatprep.subr.mxu0 0.0
    %166 = vmatpush1.msra.mxu0 0.0
    %167 = vmatprep.subr.mxu0 0.0
    %168 = vmatpush1.msra.mxu0 0.0
    %169 = vmatprep.subr.mxu0 0.0
    %170 = vmatpush1.msra.mxu0 0.0
    %171 = vmatprep.mubr.f32.mxu0 0.0
    %172 = vmatmul.mubr.f32.gmra.mrb[0].mxu0 %v105
    %v173 = vpop.f32.mrb[0].mxu0
    %v174 = vadd.f32 %v101, %v173
    %v175 = vpop.f32.mrb[0].mxu0
    %176 = vdwg.mxu0
    %177 = vst [vmem:[#allocation2] sm:$0xff] %v174
    %s178 = scalar_lea.vmem [#allocation3], 8
    %v179 = vld [vmem:[%s178] sm:$0xff]
    %v180 = vld [vmem:[%s2] sm:$0xff]
    %v181 = vld [vmem:[%s2 + $0x8] sm:$0xff]
    %v182 = vld [vmem:[%s4] sm:$0x1]
    %v184 = vlaneseq
    %v185 = vshrl.u32 %v184, 7
    %v186 = vsub.s32 0, %v185
    %v187 = vrot.slane %v182, %v186
    %v190 = vsel %vm103, %v179, 0
    %192 = vmatprep.subr.mxu0 0.0
    %193 = vmatpush1.msra.mxu0 %v180
    %194 = vmatprep.subr.mxu0 0.0
    %195 = vmatpush1.msra.mxu0 %v181
    %196 = vmatprep.subr.mxu0 0.0
    %197 = vmatpush1.msra.mxu0 0.0
    %198 = vmatprep.subr.mxu0 0.0
    %199 = vmatpush1.msra.mxu0 0.0
    %200 = vmatprep.subr.mxu0 0.0
    %201 = vmatpush1.msra.mxu0 0.0
    %202 = vmatprep.subr.mxu0 0.0
    %203 = vmatpush1.msra.mxu0 0.0
    %204 = vmatprep.subr.mxu0 0.0
    %205 = vmatpush1.msra.mxu0 0.0
    %206 = vmatprep.subr.mxu0 0.0
    %207 = vmatpush1.msra.mxu0 0.0
    %208 = vmatprep.subr.mxu0 0.0
    %209 = vmatpush1.msra.mxu0 0.0
    %210 = vmatprep.subr.mxu0 0.0
    %211 = vmatpush1.msra.mxu0 0.0
    %212 = vmatprep.subr.mxu0 0.0
    %213 = vmatpush1.msra.mxu0 0.0
    %214 = vmatprep.subr.mxu0 0.0
    %215 = vmatpush1.msra.mxu0 0.0
    %216 = vmatprep.subr.mxu0 0.0
    %217 = vmatpush1.msra.mxu0 0.0
    %218 = vmatprep.subr.mxu0 0.0
    %219 = vmatpush1.msra.mxu0 0.0
    %220 = vmatprep.subr.mxu0 0.0
    %221 = vmatpush1.msra.mxu0 0.0
    %222 = vmatprep.subr.mxu0 0.0
    %223 = vmatpush1.msra.mxu0 0.0
    %224 = vmatprep.subr.mxu0 0.0
    %225 = vmatpush1.msra.mxu0 0.0
    %226 = vmatprep.subr.mxu0 0.0
    %227 = vmatpush1.msra.mxu0 0.0
    %228 = vmatprep.subr.mxu0 0.0
    %229 = vmatpush1.msra.mxu0 0.0
    %230 = vmatprep.subr.mxu0 0.0
    %231 = vmatpush1.msra.mxu0 0.0
    %232 = vmatprep.subr.mxu0 0.0
    %233 = vmatpush1.msra.mxu0 0.0
    %234 = vmatprep.subr.mxu0 0.0
    %235 = vmatpush1.msra.mxu0 0.0
    %236 = vmatprep.subr.mxu0 0.0
    %237 = vmatpush1.msra.mxu0 0.0
    %238 = vmatprep.subr.mxu0 0.0
    %239 = vmatpush1.msra.mxu0 0.0
    %240 = vmatprep.subr.mxu0 0.0
    %241 = vmatpush1.msra.mxu0 0.0
    %242 = vmatprep.subr.mxu0 0.0
    %243 = vmatpush1.msra.mxu0 0.0
    %244 = vmatprep.subr.mxu0 0.0
    %245 = vmatpush1.msra.mxu0 0.0
    %246 = vmatprep.subr.mxu0 0.0
    %247 = vmatpush1.msra.mxu0 0.0
    %248 = vmatprep.subr.mxu0 0.0
    %249 = vmatpush1.msra.mxu0 0.0
    %250 = vmatprep.subr.mxu0 0.0
    %251 = vmatpush1.msra.mxu0 0.0
    %252 = vmatprep.subr.mxu0 0.0
    %253 = vmatpush1.msra.mxu0 0.0
    %254 = vmatprep.subr.mxu0 0.0
    %255 = vmatpush1.msra.mxu0 0.0
    %256 = vmatprep.mubr.f32.mxu0 0.0
    %257 = vmatmul.mubr.f32.gmra.mrb[0].mxu0 %v190
    %v258 = vpop.f32.mrb[0].mxu0
    %v259 = vadd.f32 %v187, %v258
    %v260 = vpop.f32.mrb[0].mxu0
    %261 = vdwg.mxu0
    %s262 = scalar_lea.vmem [#allocation2], 8
    %263 = vst [vmem:[%s262] sm:$0xff] %v259
    %s264 = scalar_lea.vmem [#allocation3], 16
    %v265 = vld [vmem:[%s264] sm:$0xff]
    %v266 = vld [vmem:[%s2] sm:$0xff]
    %v267 = vld [vmem:[%s2 + $0x8] sm:$0xff]
    %v268 = vld [vmem:[%s4] sm:$0x1]
    %v270 = vlaneseq
    %v271 = vshrl.u32 %v270, 7
    %v272 = vsub.s32 0, %v271
    %v273 = vrot.slane %v268, %v272
    %v276 = vsel %vm103, %v265, 0
    %278 = vmatprep.subr.mxu0 0.0
    %279 = vmatpush1.msra.mxu0 %v266
    %280 = vmatprep.subr.mxu0 0.0
    %281 = vmatpush1.msra.mxu0 %v267
    %282 = vmatprep.subr.mxu0 0.0
    %283 = vmatpush1.msra.mxu0 0.0
    %284 = vmatprep.subr.mxu0 0.0
    %285 = vmatpush1.msra.mxu0 0.0
    %286 = vmatprep.subr.mxu0 0.0
    %287 = vmatpush1.msra.mxu0 0.0
    %288 = vmatprep.subr.mxu0 0.0
    %289 = vmatpush1.msra.mxu0 0.0
    %290 = vmatprep.subr.mxu0 0.0
    %291 = vmatpush1.msra.mxu0 0.0
    %292 = vmatprep.subr.mxu0 0.0
    %293 = vmatpush1.msra.mxu0 0.0
    %294 = vmatprep.subr.mxu0 0.0
    %295 = vmatpush1.msra.mxu0 0.0
    %296 = vmatprep.subr.mxu0 0.0
    %297 = vmatpush1.msra.mxu0 0.0
    %298 = vmatprep.subr.mxu0 0.0
    %299 = vmatpush1.msra.mxu0 0.0
    %300 = vmatprep.subr.mxu0 0.0
    %301 = vmatpush1.msra.mxu0 0.0
    %302 = vmatprep.subr.mxu0 0.0
    %303 = vmatpush1.msra.mxu0 0.0
    %304 = vmatprep.subr.mxu0 0.0
    %305 = vmatpush1.msra.mxu0 0.0
    %306 = vmatprep.subr.mxu0 0.0
    %307 = vmatpush1.msra.mxu0 0.0
    %308 = vmatprep.subr.mxu0 0.0
    %309 = vmatpush1.msra.mxu0 0.0
    %310 = vmatprep.subr.mxu0 0.0
    %311 = vmatpush1.msra.mxu0 0.0
    %312 = vmatprep.subr.mxu0 0.0
    %313 = vmatpush1.msra.mxu0 0.0
    %314 = vmatprep.subr.mxu0 0.0
    %315 = vmatpush1.msra.mxu0 0.0
    %316 = vmatprep.subr.mxu0 0.0
    %317 = vmatpush1.msra.mxu0 0.0
    %318 = vmatprep.subr.mxu0 0.0
    %319 = vmatpush1.msra.mxu0 0.0
    %320 = vmatprep.subr.mxu0 0.0
    %321 = vmatpush1.msra.mxu0 0.0
    %322 = vmatprep.subr.mxu0 0.0
    %323 = vmatpush1.msra.mxu0 0.0
    %324 = vmatprep.subr.mxu0 0.0
    %325 = vmatpush1.msra.mxu0 0.0
    %326 = vmatprep.subr.mxu0 0.0
    %327 = vmatpush1.msra.mxu0 0.0
    %328 = vmatprep.subr.mxu0 0.0
    %329 = vmatpush1.msra.mxu0 0.0
    %330 = vmatprep.subr.mxu0 0.0
    %331 = vmatpush1.msra.mxu0 0.0
    %332 = vmatprep.subr.mxu0 0.0
    %333 = vmatpush1.msra.mxu0 0.0
    %334 = vmatprep.subr.mxu0 0.0
    %335 = vmatpush1.msra.mxu0 0.0
    %336 = vmatprep.subr.mxu0 0.0
    %337 = vmatpush1.msra.mxu0 0.0
    %338 = vmatprep.subr.mxu0 0.0
    %339 = vmatpush1.msra.mxu0 0.0
    %340 = vmatprep.subr.mxu0 0.0
    %341 = vmatpush1.msra.mxu0 0.0
    %342 = vmatprep.mubr.f32.mxu0 0.0
    %343 = vmatmul.mubr.f32.gmra.mrb[0].mxu0 %v276
    %v344 = vpop.f32.mrb[0].mxu0
    %v345 = vadd.f32 %v273, %v344
    %v346 = vpop.f32.mrb[0].mxu0
    %347 = vdwg.mxu0
    %s348 = scalar_lea.vmem [#allocation2], 16
    %349 = vst [vmem:[%s348] sm:$0xff] %v345
    %s350 = scalar_lea.vmem [#allocation3], 24
    %v351 = vld [vmem:[%s350] sm:$0xff]
    %v352 = vld [vmem:[%s2] sm:$0xff]
    %v353 = vld [vmem:[%s2 + $0x8] sm:$0xff]
    %v354 = vld [vmem:[%s4] sm:$0x1]
    %v356 = vlaneseq
    %v357 = vshrl.u32 %v356, 7
    %v358 = vsub.s32 0, %v357
    %v359 = vrot.slane %v354, %v358
    %v362 = vsel %vm103, %v351, 0
    %364 = vmatprep.subr.mxu0 0.0
    %365 = vmatpush1.msra.mxu0 %v352
    %366 = vmatprep.subr.mxu0 0.0
    %367 = vmatpush1.msra.mxu0 %v353
    %368 = vmatprep.subr.mxu0 0.0
    %369 = vmatpush1.msra.mxu0 0.0
    %370 = vmatprep.subr.mxu0 0.0
    %371 = vmatpush1.msra.mxu0 0.0
    %372 = vmatprep.subr.mxu0 0.0
    %373 = vmatpush1.msra.mxu0 0.0
    %374 = vmatprep.subr.mxu0 0.0
    %375 = vmatpush1.msra.mxu0 0.0
    %376 = vmatprep.subr.mxu0 0.0
    %377 = vmatpush1.msra.mxu0 0.0
    %378 = vmatprep.subr.mxu0 0.0
    %379 = vmatpush1.msra.mxu0 0.0
    %380 = vmatprep.subr.mxu0 0.0
    %381 = vmatpush1.msra.mxu0 0.0
    %382 = vmatprep.subr.mxu0 0.0
    %383 = vmatpush1.msra.mxu0 0.0
    %384 = vmatprep.subr.mxu0 0.0
    %385 = vmatpush1.msra.mxu0 0.0
    %386 = vmatprep.subr.mxu0 0.0
    %387 = vmatpush1.msra.mxu0 0.0
    %388 = vmatprep.subr.mxu0 0.0
    %389 = vmatpush1.msra.mxu0 0.0
    %390 = vmatprep.subr.mxu0 0.0
    %391 = vmatpush1.msra.mxu0 0.0
    %392 = vmatprep.subr.mxu0 0.0
    %393 = vmatpush1.msra.mxu0 0.0
    %394 = vmatprep.subr.mxu0 0.0
    %395 = vmatpush1.msra.mxu0 0.0
    %396 = vmatprep.subr.mxu0 0.0
    %397 = vmatpush1.msra.mxu0 0.0
    %398 = vmatprep.subr.mxu0 0.0
    %399 = vmatpush1.msra.mxu0 0.0
    %400 = vmatprep.subr.mxu0 0.0
    %401 = vmatpush1.msra.mxu0 0.0
    %402 = vmatprep.subr.mxu0 0.0
    %403 = vmatpush1.msra.mxu0 0.0
    %404 = vmatprep.subr.mxu0 0.0
    %405 = vmatpush1.msra.mxu0 0.0
    %406 = vmatprep.subr.mxu0 0.0
    %407 = vmatpush1.msra.mxu0 0.0
    %408 = vmatprep.subr.mxu0 0.0
    %409 = vmatpush1.msra.mxu0 0.0
    %410 = vmatprep.subr.mxu0 0.0
    %411 = vmatpush1.msra.mxu0 0.0
    %412 = vmatprep.subr.mxu0 0.0
    %413 = vmatpush1.msra.mxu0 0.0
    %414 = vmatprep.subr.mxu0 0.0
    %415 = vmatpush1.msra.mxu0 0.0
    %416 = vmatprep.subr.mxu0 0.0
    %417 = vmatpush1.msra.mxu0 0.0
    %418 = vmatprep.subr.mxu0 0.0
    %419 = vmatpush1.msra.mxu0 0.0
    %420 = vmatprep.subr.mxu0 0.0
    %421 = vmatpush1.msra.mxu0 0.0
    %422 = vmatprep.subr.mxu0 0.0
    %423 = vmatpush1.msra.mxu0 0.0
    %424 = vmatprep.subr.mxu0 0.0
    %425 = vmatpush1.msra.mxu0 0.0
    %426 = vmatprep.subr.mxu0 0.0
    %427 = vmatpush1.msra.mxu0 0.0
    %428 = vmatprep.mubr.f32.mxu0 0.0
    %429 = vmatmul.mubr.f32.gmra.mrb[0].mxu0 %v362
    %v430 = vpop.f32.mrb[0].mxu0
    %v431 = vadd.f32 %v359, %v430
    %v432 = vpop.f32.mrb[0].mxu0
    %433 = vdwg.mxu0
    %s434 = scalar_lea.vmem [#allocation2], 24
    %435 = vst [vmem:[%s434] sm:$0xff] %v431
    %s436 = scalar_lea.vmem [#allocation3], 32
    %v437 = vld [vmem:[%s436] sm:$0xff]
    %v438 = vld [vmem:[%s2] sm:$0xff]
    %v439 = vld [vmem:[%s2 + $0x8] sm:$0xff]
    %v440 = vld [vmem:[%s4] sm:$0x1]
    %v442 = vlaneseq
    %v443 = vshrl.u32 %v442, 7
    %v444 = vsub.s32 0, %v443
    %v445 = vrot.slane %v440, %v444
    %v448 = vsel %vm103, %v437, 0
    %450 = vmatprep.subr.mxu0 0.0
    %451 = vmatpush1.msra.mxu0 %v438
    %452 = vmatprep.subr.mxu0 0.0
    %453 = vmatpush1.msra.mxu0 %v439
    %454 = vmatprep.subr.mxu0 0.0
    %455 = vmatpush1.msra.mxu0 0.0
    %456 = vmatprep.subr.mxu0 0.0
    %457 = vmatpush1.msra.mxu0 0.0
    %458 = vmatprep.subr.mxu0 0.0
    %459 = vmatpush1.msra.mxu0 0.0
    %460 = vmatprep.subr.mxu0 0.0
    %461 = vmatpush1.msra.mxu0 0.0
    %462 = vmatprep.subr.mxu0 0.0
    %463 = vmatpush1.msra.mxu0 0.0
    %464 = vmatprep.subr.mxu0 0.0
    %465 = vmatpush1.msra.mxu0 0.0
    %466 = vmatprep.subr.mxu0 0.0
    %467 = vmatpush1.msra.mxu0 0.0
    %468 = vmatprep.subr.mxu0 0.0
    %469 = vmatpush1.msra.mxu0 0.0
    %470 = vmatprep.subr.mxu0 0.0
    %471 = vmatpush1.msra.mxu0 0.0
    %472 = vmatprep.subr.mxu0 0.0
    %473 = vmatpush1.msra.mxu0 0.0
    %474 = vmatprep.subr.mxu0 0.0
    %475 = vmatpush1.msra.mxu0 0.0
    %476 = vmatprep.subr.mxu0 0.0
    %477 = vmatpush1.msra.mxu0 0.0
    %478 = vmatprep.subr.mxu0 0.0
    %479 = vmatpush1.msra.mxu0 0.0
    %480 = vmatprep.subr.mxu0 0.0
    %481 = vmatpush1.msra.mxu0 0.0
    %482 = vmatprep.subr.mxu0 0.0
    %483 = vmatpush1.msra.mxu0 0.0
    %484 = vmatprep.subr.mxu0 0.0
    %485 = vmatpush1.msra.mxu0 0.0
    %486 = vmatprep.subr.mxu0 0.0
    %487 = vmatpush1.msra.mxu0 0.0
    %488 = vmatprep.subr.mxu0 0.0
    %489 = vmatpush1.msra.mxu0 0.0
    %490 = vmatprep.subr.mxu0 0.0
    %491 = vmatpush1.msra.mxu0 0.0
    %492 = vmatprep.subr.mxu0 0.0
    %493 = vmatpush1.msra.mxu0 0.0
    %494 = vmatprep.subr.mxu0 0.0
    %495 = vmatpush1.msra.mxu0 0.0
    %496 = vmatprep.subr.mxu0 0.0
    %497 = vmatpush1.msra.mxu0 0.0
    %498 = vmatprep.subr.mxu0 0.0
    %499 = vmatpush1.msra.mxu0 0.0
    %500 = vmatprep.subr.mxu0 0.0
    %501 = vmatpush1.msra.mxu0 0.0
    %502 = vmatprep.subr.mxu0 0.0
    %503 = vmatpush1.msra.mxu0 0.0
    %504 = vmatprep.subr.mxu0 0.0
    %505 = vmatpush1.msra.mxu0 0.0
    %506 = vmatprep.subr.mxu0 0.0
    %507 = vmatpush1.msra.mxu0 0.0
    %508 = vmatprep.subr.mxu0 0.0
    %509 = vmatpush1.msra.mxu0 0.0
    %510 = vmatprep.subr.mxu0 0.0
    %511 = vmatpush1.msra.mxu0 0.0
    %512 = vmatprep.subr.mxu0 0.0
    %513 = vmatpush1.msra.mxu0 0.0
    %514 = vmatprep.mubr.f32.mxu0 0.0
    %515 = vmatmul.mubr.f32.gmra.mrb[0].mxu0 %v448
    %v516 = vpop.f32.mrb[0].mxu0
    %v517 = vadd.f32 %v445, %v516
    %v518 = vpop.f32.mrb[0].mxu0
    %519 = vdwg.mxu0
    %s520 = scalar_lea.vmem [#allocation2], 32
    %521 = vst [vmem:[%s520] sm:$0xff] %v517
    %s522 = scalar_lea.vmem [#allocation3], 40
    %v523 = vld [vmem:[%s522] sm:$0xff]
    %v524 = vld [vmem:[%s2] sm:$0xff]
    %v525 = vld [vmem:[%s2 + $0x8] sm:$0xff]
    %v526 = vld [vmem:[%s4] sm:$0x1]
    %v528 = vlaneseq
    %v529 = vshrl.u32 %v528, 7
    %v530 = vsub.s32 0, %v529
    %v531 = vrot.slane %v526, %v530
    %v534 = vsel %vm103, %v523, 0
    %536 = vmatprep.subr.mxu0 0.0
    %537 = vmatpush1.msra.mxu0 %v524
    %538 = vmatprep.subr.mxu0 0.0
    %539 = vmatpush1.msra.mxu0 %v525
    %540 = vmatprep.subr.mxu0 0.0
    %541 = vmatpush1.msra.mxu0 0.0
    %542 = vmatprep.subr.mxu0 0.0
    %543 = vmatpush1.msra.mxu0 0.0
    %544 = vmatprep.subr.mxu0 0.0
    %545 = vmatpush1.msra.mxu0 0.0
    %546 = vmatprep.subr.mxu0 0.0
    %547 = vmatpush1.msra.mxu0 0.0
    %548 = vmatprep.subr.mxu0 0.0
    %549 = vmatpush1.msra.mxu0 0.0
    %550 = vmatprep.subr.mxu0 0.0
    %551 = vmatpush1.msra.mxu0 0.0
    %552 = vmatprep.subr.mxu0 0.0
    %553 = vmatpush1.msra.mxu0 0.0
    %554 = vmatprep.subr.mxu0 0.0
    %555 = vmatpush1.msra.mxu0 0.0
    %556 = vmatprep.subr.mxu0 0.0
    %557 = vmatpush1.msra.mxu0 0.0
    %558 = vmatprep.subr.mxu0 0.0
    %559 = vmatpush1.msra.mxu0 0.0
    %560 = vmatprep.subr.mxu0 0.0
    %561 = vmatpush1.msra.mxu0 0.0
    %562 = vmatprep.subr.mxu0 0.0
    %563 = vmatpush1.msra.mxu0 0.0
    %564 = vmatprep.subr.mxu0 0.0
    %565 = vmatpush1.msra.mxu0 0.0
    %566 = vmatprep.subr.mxu0 0.0
    %567 = vmatpush1.msra.mxu0 0.0
    %568 = vmatprep.subr.mxu0 0.0
    %569 = vmatpush1.msra.mxu0 0.0
    %570 = vmatprep.subr.mxu0 0.0
    %571 = vmatpush1.msra.mxu0 0.0
    %572 = vmatprep.subr.mxu0 0.0
    %573 = vmatpush1.msra.mxu0 0.0
    %574 = vmatprep.subr.mxu0 0.0
    %575 = vmatpush1.msra.mxu0 0.0
    %576 = vmatprep.subr.mxu0 0.0
    %577 = vmatpush1.msra.mxu0 0.0
    %578 = vmatprep.subr.mxu0 0.0
    %579 = vmatpush1.msra.mxu0 0.0
    %580 = vmatprep.subr.mxu0 0.0
    %581 = vmatpush1.msra.mxu0 0.0
    %582 = vmatprep.subr.mxu0 0.0
    %583 = vmatpush1.msra.mxu0 0.0
    %584 = vmatprep.subr.mxu0 0.0
    %585 = vmatpush1.msra.mxu0 0.0
    %586 = vmatprep.subr.mxu0 0.0
    %587 = vmatpush1.msra.mxu0 0.0
    %588 = vmatprep.subr.mxu0 0.0
    %589 = vmatpush1.msra.mxu0 0.0
    %590 = vmatprep.subr.mxu0 0.0
    %591 = vmatpush1.msra.mxu0 0.0
    %592 = vmatprep.subr.mxu0 0.0
    %593 = vmatpush1.msra.mxu0 0.0
    %594 = vmatprep.subr.mxu0 0.0
    %595 = vmatpush1.msra.mxu0 0.0
    %596 = vmatprep.subr.mxu0 0.0
    %597 = vmatpush1.msra.mxu0 0.0
    %598 = vmatprep.subr.mxu0 0.0
    %599 = vmatpush1.msra.mxu0 0.0
    %600 = vmatprep.mubr.f32.mxu0 0.0
    %601 = vmatmul.mubr.f32.gmra.mrb[0].mxu0 %v534
    %v602 = vpop.f32.mrb[0].mxu0
    %v603 = vadd.f32 %v531, %v602
    %v604 = vpop.f32.mrb[0].mxu0
    %605 = vdwg.mxu0
    %s606 = scalar_lea.vmem [#allocation2], 40
    %607 = vst [vmem:[%s606] sm:$0xff] %v603
    %s608 = scalar_lea.vmem [#allocation3], 48
    %v609 = vld [vmem:[%s608] sm:$0xff]
    %v610 = vld [vmem:[%s2] sm:$0xff]
    %v611 = vld [vmem:[%s2 + $0x8] sm:$0xff]
    %v612 = vld [vmem:[%s4] sm:$0x1]
    %v614 = vlaneseq
    %v615 = vshrl.u32 %v614, 7
    %v616 = vsub.s32 0, %v615
    %v617 = vrot.slane %v612, %v616
    %v620 = vsel %vm103, %v609, 0
    %622 = vmatprep.subr.mxu0 0.0
    %623 = vmatpush1.msra.mxu0 %v610
    %624 = vmatprep.subr.mxu0 0.0
    %625 = vmatpush1.msra.mxu0 %v611
    %626 = vmatprep.subr.mxu0 0.0
    %627 = vmatpush1.msra.mxu0 0.0
    %628 = vmatprep.subr.mxu0 0.0
    %629 = vmatpush1.msra.mxu0 0.0
    %630 = vmatprep.subr.mxu0 0.0
    %631 = vmatpush1.msra.mxu0 0.0
    %632 = vmatprep.subr.mxu0 0.0
    %633 = vmatpush1.msra.mxu0 0.0
    %634 = vmatprep.subr.mxu0 0.0
    %635 = vmatpush1.msra.mxu0 0.0
    %636 = vmatprep.subr.mxu0 0.0
    %637 = vmatpush1.msra.mxu0 0.0
    %638 = vmatprep.subr.mxu0 0.0
    %639 = vmatpush1.msra.mxu0 0.0
    %640 = vmatprep.subr.mxu0 0.0
    %641 = vmatpush1.msra.mxu0 0.0
    %642 = vmatprep.subr.mxu0 0.0
    %643 = vmatpush1.msra.mxu0 0.0
    %644 = vmatprep.subr.mxu0 0.0
    %645 = vmatpush1.msra.mxu0 0.0
    %646 = vmatprep.subr.mxu0 0.0
    %647 = vmatpush1.msra.mxu0 0.0
    %648 = vmatprep.subr.mxu0 0.0
    %649 = vmatpush1.msra.mxu0 0.0
    %650 = vmatprep.subr.mxu0 0.0
    %651 = vmatpush1.msra.mxu0 0.0
    %652 = vmatprep.subr.mxu0 0.0
    %653 = vmatpush1.msra.mxu0 0.0
    %654 = vmatprep.subr.mxu0 0.0
    %655 = vmatpush1.msra.mxu0 0.0
    %656 = vmatprep.subr.mxu0 0.0
    %657 = vmatpush1.msra.mxu0 0.0
    %658 = vmatprep.subr.mxu0 0.0
    %659 = vmatpush1.msra.mxu0 0.0
    %660 = vmatprep.subr.mxu0 0.0
    %661 = vmatpush1.msra.mxu0 0.0
    %662 = vmatprep.subr.mxu0 0.0
    %663 = vmatpush1.msra.mxu0 0.0
    %664 = vmatprep.subr.mxu0 0.0
    %665 = vmatpush1.msra.mxu0 0.0
    %666 = vmatprep.subr.mxu0 0.0
    %667 = vmatpush1.msra.mxu0 0.0
    %668 = vmatprep.subr.mxu0 0.0
    %669 = vmatpush1.msra.mxu0 0.0
    %670 = vmatprep.subr.mxu0 0.0
    %671 = vmatpush1.msra.mxu0 0.0
    %672 = vmatprep.subr.mxu0 0.0
    %673 = vmatpush1.msra.mxu0 0.0
    %674 = vmatprep.subr.mxu0 0.0
    %675 = vmatpush1.msra.mxu0 0.0
    %676 = vmatprep.subr.mxu0 0.0
    %677 = vmatpush1.msra.mxu0 0.0
    %678 = vmatprep.subr.mxu0 0.0
    %679 = vmatpush1.msra.mxu0 0.0
    %680 = vmatprep.subr.mxu0 0.0
    %681 = vmatpush1.msra.mxu0 0.0
    %682 = vmatprep.subr.mxu0 0.0
    %683 = vmatpush1.msra.mxu0 0.0
    %684 = vmatprep.subr.mxu0 0.0
    %685 = vmatpush1.msra.mxu0 0.0
    %686 = vmatprep.mubr.f32.mxu0 0.0
    %687 = vmatmul.mubr.f32.gmra.mrb[0].mxu0 %v620
    %v688 = vpop.f32.mrb[0].mxu0
    %v689 = vadd.f32 %v617, %v688
    %v690 = vpop.f32.mrb[0].mxu0
    %691 = vdwg.mxu0
    %s692 = scalar_lea.vmem [#allocation2], 48
    %693 = vst [vmem:[%s692] sm:$0xff] %v689
    %s694 = scalar_lea.vmem [#allocation3], 56
    %v695 = vld [vmem:[%s694] sm:$0xff]
    %v696 = vld [vmem:[%s2] sm:$0xff]
    %v697 = vld [vmem:[%s2 + $0x8] sm:$0xff]
    %v698 = vld [vmem:[%s4] sm:$0x1]
    %v700 = vlaneseq
    %v701 = vshrl.u32 %v700, 7
    %v702 = vsub.s32 0, %v701
    %v703 = vrot.slane %v698, %v702
    %v706 = vsel %vm103, %v695, 0
    %708 = vmatprep.subr.mxu0 0.0
    %709 = vmatpush1.msra.mxu0 %v696
    %710 = vmatprep.subr.mxu0 0.0
    %711 = vmatpush1.msra.mxu0 %v697
    %712 = vmatprep.subr.mxu0 0.0
    %713 = vmatpush1.msra.mxu0 0.0
    %714 = vmatprep.subr.mxu0 0.0
    %715 = vmatpush1.msra.mxu0 0.0
    %716 = vmatprep.subr.mxu0 0.0
    %717 = vmatpush1.msra.mxu0 0.0
    %718 = vmatprep.subr.mxu0 0.0
    %719 = vmatpush1.msra.mxu0 0.0
    %720 = vmatprep.subr.mxu0 0.0
    %721 = vmatpush1.msra.mxu0 0.0
    %722 = vmatprep.subr.mxu0 0.0
    %723 = vmatpush1.msra.mxu0 0.0
    %724 = vmatprep.subr.mxu0 0.0
    %725 = vmatpush1.msra.mxu0 0.0
    %726 = vmatprep.subr.mxu0 0.0
    %727 = vmatpush1.msra.mxu0 0.0
    %728 = vmatprep.subr.mxu0 0.0
    %729 = vmatpush1.msra.mxu0 0.0
    %730 = vmatprep.subr.mxu0 0.0
    %731 = vmatpush1.msra.mxu0 0.0
    %732 = vmatprep.subr.mxu0 0.0
    %733 = vmatpush1.msra.mxu0 0.0
    %734 = vmatprep.subr.mxu0 0.0
    %735 = vmatpush1.msra.mxu0 0.0
    %736 = vmatprep.subr.mxu0 0.0
    %737 = vmatpush1.msra.mxu0 0.0
    %738 = vmatprep.subr.mxu0 0.0
    %739 = vmatpush1.msra.mxu0 0.0
    %740 = vmatprep.subr.mxu0 0.0
    %741 = vmatpush1.msra.mxu0 0.0
    %742 = vmatprep.subr.mxu0 0.0
    %743 = vmatpush1.msra.mxu0 0.0
    %744 = vmatprep.subr.mxu0 0.0
    %745 = vmatpush1.msra.mxu0 0.0
    %746 = vmatprep.subr.mxu0 0.0
    %747 = vmatpush1.msra.mxu0 0.0
    %748 = vmatprep.subr.mxu0 0.0
    %749 = vmatpush1.msra.mxu0 0.0
    %750 = vmatprep.subr.mxu0 0.0
    %751 = vmatpush1.msra.mxu0 0.0
    %752 = vmatprep.subr.mxu0 0.0
    %753 = vmatpush1.msra.mxu0 0.0
    %754 = vmatprep.subr.mxu0 0.0
    %755 = vmatpush1.msra.mxu0 0.0
    %756 = vmatprep.subr.mxu0 0.0
    %757 = vmatpush1.msra.mxu0 0.0
    %758 = vmatprep.subr.mxu0 0.0
    %759 = vmatpush1.msra.mxu0 0.0
    %760 = vmatprep.subr.mxu0 0.0
    %761 = vmatpush1.msra.mxu0 0.0
    %762 = vmatprep.subr.mxu0 0.0
    %763 = vmatpush1.msra.mxu0 0.0
    %764 = vmatprep.subr.mxu0 0.0
    %765 = vmatpush1.msra.mxu0 0.0
    %766 = vmatprep.subr.mxu0 0.0
    %767 = vmatpush1.msra.mxu0 0.0
    %768 = vmatprep.subr.mxu0 0.0
    %769 = vmatpush1.msra.mxu0 0.0
    %770 = vmatprep.subr.mxu0 0.0
    %771 = vmatpush1.msra.mxu0 0.0
    %772 = vmatprep.mubr.f32.mxu0 0.0
    %773 = vmatmul.mubr.f32.gmra.mrb[0].mxu0 %v706
    %v774 = vpop.f32.mrb[0].mxu0
    %v775 = vadd.f32 %v703, %v774
    %v776 = vpop.f32.mrb[0].mxu0
    %777 = vdwg.mxu0
    %s778 = scalar_lea.vmem [#allocation2], 56
    %779 = vst [vmem:[%s778] sm:$0xff] %v775
    %v780 = vld [vmem:[#allocation2] sm:$0xff]
    %v781 = vld [vmem:[%s1] sm:$0xff]
    %v782 = vld [vmem:[#allocation6] sm:$0xff]
    %v783 = vld [vmem:[#allocation6 + $0x8] sm:$0xff]
    %v784 = vld [vmem:[#allocation6 + $0x10] sm:$0xff]
    %v785 = vld [vmem:[#allocation6 + $0x18] sm:$0xff]
    %v786 = vld [vmem:[#allocation6 + $0x20] sm:$0xff]
    %v787 = vld [vmem:[#allocation6 + $0x28] sm:$0xff]
    %v788 = vld [vmem:[#allocation6 + $0x30] sm:$0xff]
    %v789 = vld [vmem:[#allocation6 + $0x38] sm:$0xff]
    %v790 = vld [vmem:[#allocation6 + $0x40] sm:$0xff]
    %v791 = vld [vmem:[#allocation6 + $0x48] sm:$0xff]
    %v792 = vld [vmem:[#allocation6 + $0x50] sm:$0xff]
    %v793 = vld [vmem:[#allocation6 + $0x58] sm:$0xff]
    %v794 = vld [vmem:[#allocation6 + $0x60] sm:$0xff]
    %v795 = vld [vmem:[#allocation6 + $0x68] sm:$0xff]
    %v796 = vld [vmem:[#allocation6 + $0x70] sm:$0xff]
    %v797 = vld [vmem:[#allocation6 + $0x78] sm:$0xff]
    %v798 = vld [vmem:[%s5] sm:$0x1]
    %v800 = vlaneseq
    %v801 = vshrl.u32 %v800, 7
    %v802 = vsub.s32 0, %v801
    %v803 = vrot.slane %v798, %v802
    %805 = vmatprep.subr.mxu0 0.0
    %806 = vmatpush1.msra.mxu0 %v782
    %807 = vmatprep.subr.mxu0 0.0
    %808 = vmatpush1.msra.mxu0 %v783
    %809 = vmatprep.subr.mxu0 0.0
    %810 = vmatpush1.msra.mxu0 %v784
    %811 = vmatprep.subr.mxu0 0.0
    %812 = vmatpush1.msra.mxu0 %v785
    %813 = vmatprep.subr.mxu0 0.0
    %814 = vmatpush1.msra.mxu0 %v786
    %815 = vmatprep.subr.mxu0 0.0
    %816 = vmatpush1.msra.mxu0 %v787
    %817 = vmatprep.subr.mxu0 0.0
    %818 = vmatpush1.msra.mxu0 %v788
    %819 = vmatprep.subr.mxu0 0.0
    %820 = vmatpush1.msra.mxu0 %v789
    %821 = vmatprep.subr.mxu0 0.0
    %822 = vmatpush1.msra.mxu0 %v790
    %823 = vmatprep.subr.mxu0 0.0
    %824 = vmatpush1.msra.mxu0 %v791
    %825 = vmatprep.subr.mxu0 0.0
    %826 = vmatpush1.msra.mxu0 %v792
    %827 = vmatprep.subr.mxu0 0.0
    %828 = vmatpush1.msra.mxu0 %v793
    %829 = vmatprep.subr.mxu0 0.0
    %830 = vmatpush1.msra.mxu0 %v794
    %831 = vmatprep.subr.mxu0 0.0
    %832 = vmatpush1.msra.mxu0 %v795
    %833 = vmatprep.subr.mxu0 0.0
    %834 = vmatpush1.msra.mxu0 %v796
    %835 = vmatprep.subr.mxu0 0.0
    %836 = vmatpush1.msra.mxu0 %v797
    %837 = vmatprep.subr.mxu0 0.0
    %838 = vmatpush1.msra.mxu0 0.0
    %839 = vmatprep.subr.mxu0 0.0
    %840 = vmatpush1.msra.mxu0 0.0
    %841 = vmatprep.subr.mxu0 0.0
    %842 = vmatpush1.msra.mxu0 0.0
    %843 = vmatprep.subr.mxu0 0.0
    %844 = vmatpush1.msra.mxu0 0.0
    %845 = vmatprep.subr.mxu0 0.0
    %846 = vmatpush1.msra.mxu0 0.0
    %847 = vmatprep.subr.mxu0 0.0
    %848 = vmatpush1.msra.mxu0 0.0
    %849 = vmatprep.subr.mxu0 0.0
    %850 = vmatpush1.msra.mxu0 0.0
    %851 = vmatprep.subr.mxu0 0.0
    %852 = vmatpush1.msra.mxu0 0.0
    %853 = vmatprep.subr.mxu0 0.0
    %854 = vmatpush1.msra.mxu0 0.0
    %855 = vmatprep.subr.mxu0 0.0
    %856 = vmatpush1.msra.mxu0 0.0
    %857 = vmatprep.subr.mxu0 0.0
    %858 = vmatpush1.msra.mxu0 0.0
    %859 = vmatprep.subr.mxu0 0.0
    %860 = vmatpush1.msra.mxu0 0.0
    %861 = vmatprep.subr.mxu0 0.0
    %862 = vmatpush1.msra.mxu0 0.0
    %863 = vmatprep.subr.mxu0 0.0
    %864 = vmatpush1.msra.mxu0 0.0
    %865 = vmatprep.subr.mxu0 0.0
    %866 = vmatpush1.msra.mxu0 0.0
    %867 = vmatprep.subr.mxu0 0.0
    %868 = vmatpush1.msra.mxu0 0.0
    %869 = vmatprep.mubr.f32.mxu0 0.0
    %870 = vmatmul.mubr.f32.gmra.mrb[0].mxu0 %v781
    %v871 = vpop.f32.mrb[0].mxu0
    %v872 = vadd.f32 %v803, %v871
    %v873 = vpop.f32.mrb[0].mxu0
    %874 = vdwg.mxu0
    %v875 = vadd.f32 %v780, %v872
    %v876 = vxor.u32 %v875, 2147483648
    %v877 = vmul.f32 %v876, 1.442695
    %v878 = vpow.pop %v877
    %v879 = vadd.f32 %v878, 1.0
    %v880 = vrcp.pop %v879
    %v881 = vmul.f32 1.0, %v880
    %882 = vrot.lane.b32.xlu0 %v881, 96
    %v883 = vpop.permute.xlu0 %882
    %884 = vrot.lane.b32.xlu0 %v881, 64
    %v885 = vpop.permute.xlu0 %884
    %v886 = vmul.f32 %v883, %v872
    %v887 = vadd.f32 %v780, %v886
    %v888 = vtanh.pop %v887
    %v889 = vsub.f32 %v781, %v888
    %v890 = vmul.f32 %v885, %v889
    %v891 = vadd.f32 %v888, %v890
    %v892 = vld [vmem:[#allocation8] sm:$0xff]
    %v893 = vld [vmem:[#allocation8 + $0x8] sm:$0xff]
    %v894 = vld [vmem:[#allocation8 + $0x10] sm:$0xff]
    %v895 = vld [vmem:[#allocation8 + $0x18] sm:$0xff]
    %v896 = vld [vmem:[#allocation8 + $0x20] sm:$0xff]
    %v897 = vld [vmem:[#allocation8 + $0x28] sm:$0xff]
    %v898 = vld [vmem:[#allocation8 + $0x30] sm:$0xff]
    %v899 = vld [vmem:[#allocation8 + $0x38] sm:$0xff]
    %v900 = vld [vmem:[#allocation8 + $0x40] sm:$0xff]
    %v901 = vld [vmem:[#allocation8 + $0x48] sm:$0xff]
    %v902 = vld [vmem:[#allocation8 + $0x50] sm:$0xff]
    %v903 = vld [vmem:[#allocation8 + $0x58] sm:$0xff]
    %v904 = vld [vmem:[#allocation8 + $0x60] sm:$0xff]
    %v905 = vld [vmem:[#allocation8 + $0x68] sm:$0xff]
    %v906 = vld [vmem:[#allocation8 + $0x70] sm:$0xff]
    %v907 = vld [vmem:[#allocation8 + $0x78] sm:$0xff]
    %v908 = vld [vmem:[%s7] sm:$0x1]
    %v910 = vlaneseq
    %v911 = vshrl.u32 %v910, 7
    %v912 = vsub.s32 0, %v911
    %v913 = vrot.slane %v908, %v912
    %915 = vmatprep.subr.mxu0 0.0
    %916 = vmatpush1.msra.mxu0 %v892
    %917 = vmatprep.subr.mxu0 0.0
    %918 = vmatpush1.msra.mxu0 %v893
    %919 = vmatprep.subr.mxu0 0.0
    %920 = vmatpush1.msra.mxu0 %v894
    %921 = vmatprep.subr.mxu0 0.0
    %922 = vmatpush1.msra.mxu0 %v895
    %923 = vmatprep.subr.mxu0 0.0
    %924 = vmatpush1.msra.mxu0 %v896
    %925 = vmatprep.subr.mxu0 0.0
    %926 = vmatpush1.msra.mxu0 %v897
    %927 = vmatprep.subr.mxu0 0.0
    %928 = vmatpush1.msra.mxu0 %v898
    %929 = vmatprep.subr.mxu0 0.0
    %930 = vmatpush1.msra.mxu0 %v899
    %931 = vmatprep.subr.mxu0 0.0
    %932 = vmatpush1.msra.mxu0 %v900
    %933 = vmatprep.subr.mxu0 0.0
    %934 = vmatpush1.msra.mxu0 %v901
    %935 = vmatprep.subr.mxu0 0.0
    %936 = vmatpush1.msra.mxu0 %v902
    %937 = vmatprep.subr.mxu0 0.0
    %938 = vmatpush1.msra.mxu0 %v903
    %939 = vmatprep.subr.mxu0 0.0
    %940 = vmatpush1.msra.mxu0 %v904
    %941 = vmatprep.subr.mxu0 0.0
    %942 = vmatpush1.msra.mxu0 %v905
    %943 = vmatprep.subr.mxu0 0.0
    %944 = vmatpush1.msra.mxu0 %v906
    %945 = vmatprep.subr.mxu0 0.0
    %946 = vmatpush1.msra.mxu0 %v907
    %947 = vmatprep.subr.mxu0 0.0
    %948 = vmatpush1.msra.mxu0 0.0
    %949 = vmatprep.subr.mxu0 0.0
    %950 = vmatpush1.msra.mxu0 0.0
    %951 = vmatprep.subr.mxu0 0.0
    %952 = vmatpush1.msra.mxu0 0.0
    %953 = vmatprep.subr.mxu0 0.0
    %954 = vmatpush1.msra.mxu0 0.0
    %955 = vmatprep.subr.mxu0 0.0
    %956 = vmatpush1.msra.mxu0 0.0
    %957 = vmatprep.subr.mxu0 0.0
    %958 = vmatpush1.msra.mxu0 0.0
    %959 = vmatprep.subr.mxu0 0.0
    %960 = vmatpush1.msra.mxu0 0.0
    %961 = vmatprep.subr.mxu0 0.0
    %962 = vmatpush1.msra.mxu0 0.0
    %963 = vmatprep.subr.mxu0 0.0
    %964 = vmatpush1.msra.mxu0 0.0
    %965 = vmatprep.subr.mxu0 0.0
    %966 = vmatpush1.msra.mxu0 0.0
    %967 = vmatprep.subr.mxu0 0.0
    %968 = vmatpush1.msra.mxu0 0.0
    %969 = vmatprep.subr.mxu0 0.0
    %970 = vmatpush1.msra.mxu0 0.0
    %971 = vmatprep.subr.mxu0 0.0
    %972 = vmatpush1.msra.mxu0 0.0
    %973 = vmatprep.subr.mxu0 0.0
    %974 = vmatpush1.msra.mxu0 0.0
    %975 = vmatprep.subr.mxu0 0.0
    %976 = vmatpush1.msra.mxu0 0.0
    %977 = vmatprep.subr.mxu0 0.0
    %978 = vmatpush1.msra.mxu0 0.0
    %979 = vmatprep.mubr.f32.mxu0 0.0
    %980 = vmatmul.mubr.f32.gmra.mrb[0].mxu0 %v891
    %v981 = vpop.f32.mrb[0].mxu0
    %v982 = vadd.f32 %v913, %v981
    %v983 = vpop.f32.mrb[0].mxu0
    %984 = vdwg.mxu0
    %v985 = vmax.f32 %v982, 0.0
    %v986 = vld [vmem:[#allocation9] sm:$0xff]
    %v987 = vld [vmem:[#allocation9 + $0x8] sm:$0xff]
    %v988 = vld [vmem:[#allocation9 + $0x10] sm:$0xff]
    %v989 = vld [vmem:[#allocation9 + $0x18] sm:$0xff]
    %v990 = vld [vmem:[#allocation9 + $0x20] sm:$0xff]
    %v991 = vld [vmem:[#allocation9 + $0x28] sm:$0xff]
    %v992 = vld [vmem:[#allocation9 + $0x30] sm:$0xff]
    %v993 = vld [vmem:[#allocation9 + $0x38] sm:$0xff]
    %v994 = vld [vmem:[#allocation9 + $0x40] sm:$0xff]
    %v995 = vld [vmem:[#allocation9 + $0x48] sm:$0xff]
    %v996 = vld [vmem:[#allocation9 + $0x50] sm:$0xff]
    %v997 = vld [vmem:[#allocation9 + $0x58] sm:$0xff]
    %v998 = vld [vmem:[#allocation9 + $0x60] sm:$0xff]
    %v999 = vld [vmem:[#allocation9 + $0x68] sm:$0xff]
    %v1000 = vld [vmem:[#allocation9 + $0x70] sm:$0xff]
    %v1001 = vld [vmem:[#allocation9 + $0x78] sm:$0xff]
    %v1002 = vld [vmem:[%s9] sm:$0x1]
    %v1004 = vlaneseq
    %v1005 = vshrl.u32 %v1004, 7
    %v1006 = vsub.s32 0, %v1005
    %v1007 = vrot.slane %v1002, %v1006
    %1009 = vmatprep.subr.mxu0 0.0
    %1010 = vmatpush1.msra.mxu0 %v986
    %1011 = vmatprep.subr.mxu0 0.0
    %1012 = vmatpush1.msra.mxu0 %v987
    %1013 = vmatprep.subr.mxu0 0.0
    %1014 = vmatpush1.msra.mxu0 %v988
    %1015 = vmatprep.subr.mxu0 0.0
    %1016 = vmatpush1.msra.mxu0 %v989
    %1017 = vmatprep.subr.mxu0 0.0
    %1018 = vmatpush1.msra.mxu0 %v990
    %1019 = vmatprep.subr.mxu0 0.0
    %1020 = vmatpush1.msra.mxu0 %v991
    %1021 = vmatprep.subr.mxu0 0.0
    %1022 = vmatpush1.msra.mxu0 %v992
    %1023 = vmatprep.subr.mxu0 0.0
    %1024 = vmatpush1.msra.mxu0 %v993
    %1025 = vmatprep.subr.mxu0 0.0
    %1026 = vmatpush1.msra.mxu0 %v994
    %1027 = vmatprep.subr.mxu0 0.0
    %1028 = vmatpush1.msra.mxu0 %v995
    %1029 = vmatprep.subr.mxu0 0.0
    %1030 = vmatpush1.msra.mxu0 %v996
    %1031 = vmatprep.subr.mxu0 0.0
    %1032 = vmatpush1.msra.mxu0 %v997
    %1033 = vmatprep.subr.mxu0 0.0
    %1034 = vmatpush1.msra.mxu0 %v998
    %1035 = vmatprep.subr.mxu0 0.0
    %1036 = vmatpush1.msra.mxu0 %v999
    %1037 = vmatprep.subr.mxu0 0.0
    %1038 = vmatpush1.msra.mxu0 %v1000
    %1039 = vmatprep.subr.mxu0 0.0
    %1040 = vmatpush1.msra.mxu0 %v1001
    %1041 = vmatprep.subr.mxu0 0.0
    %1042 = vmatpush1.msra.mxu0 0.0
    %1043 = vmatprep.subr.mxu0 0.0
    %1044 = vmatpush1.msra.mxu0 0.0
    %1045 = vmatprep.subr.mxu0 0.0
    %1046 = vmatpush1.msra.mxu0 0.0
    %1047 = vmatprep.subr.mxu0 0.0
    %1048 = vmatpush1.msra.mxu0 0.0
    %1049 = vmatprep.subr.mxu0 0.0
    %1050 = vmatpush1.msra.mxu0 0.0
    %1051 = vmatprep.subr.mxu0 0.0
    %1052 = vmatpush1.msra.mxu0 0.0
    %1053 = vmatprep.subr.mxu0 0.0
    %1054 = vmatpush1.msra.mxu0 0.0
    %1055 = vmatprep.subr.mxu0 0.0
    %1056 = vmatpush1.msra.mxu0 0.0
    %1057 = vmatprep.subr.mxu0 0.0
    %1058 = vmatpush1.msra.mxu0 0.0
    %1059 = vmatprep.subr.mxu0 0.0
    %1060 = vmatpush1.msra.mxu0 0.0
    %1061 = vmatprep.subr.mxu0 0.0
    %1062 = vmatpush1.msra.mxu0 0.0
    %1063 = vmatprep.subr.mxu0 0.0
    %1064 = vmatpush1.msra.mxu0 0.0
    %1065 = vmatprep.subr.mxu0 0.0
    %1066 = vmatpush1.msra.mxu0 0.0
    %1067 = vmatprep.subr.mxu0 0.0
    %1068 = vmatpush1.msra.mxu0 0.0
    %1069 = vmatprep.subr.mxu0 0.0
    %1070 = vmatpush1.msra.mxu0 0.0
    %1071 = vmatprep.subr.mxu0 0.0
    %1072 = vmatpush1.msra.mxu0 0.0
    %1073 = vmatprep.mubr.f32.mxu0 0.0
    %1074 = vmatmul.mubr.f32.gmra.mrb[0].mxu0 %v985
    %v1075 = vpop.f32.mrb[0].mxu0
    %v1076 = vadd.f32 %v1007, %v1075
    %v1077 = vpop.f32.mrb[0].mxu0
    %1078 = vdwg.mxu0
    %1079 = vmax.xlane.f32.xlu0 %v1076
    %v1080 = vpop.xlane.xlu0 %1079
    %v1081 = vsub.f32 %v1076, %v1080
    %v1082 = vmul.f32 %v1081, 1.442695
    %v1083 = vpow.pop %v1082
    %1084 = vadd.xlane.f32.xlu0 %v1083
    %v1085 = vpop.xlane.xlu0 %1084
    %v1086 = vlog2.pop %v1085
    %v1087 = vmul.f32 %v1086, 0.6931472
    %v1088 = vsub.f32 %v1081, %v1087
    %1089 = vst [vmem:[#allocation11] sm:$0xff] %v1088
    %v1090 = vld [vmem:[%s262] sm:$0xff]
    %v1091 = vld [vmem:[#allocation6] sm:$0xff]
    %v1092 = vld [vmem:[#allocation6 + $0x8] sm:$0xff]
    %v1093 = vld [vmem:[#allocation6 + $0x10] sm:$0xff]
    %v1094 = vld [vmem:[#allocation6 + $0x18] sm:$0xff]
    %v1095 = vld [vmem:[#allocation6 + $0x20] sm:$0xff]
    %v1096 = vld [vmem:[#allocation6 + $0x28] sm:$0xff]
    %v1097 = vld [vmem:[#allocation6 + $0x30] sm:$0xff]
    %v1098 = vld [vmem:[#allocation6 + $0x38] sm:$0xff]
    %v1099 = vld [vmem:[#allocation6 + $0x40] sm:$0xff]
    %v1100 = vld [vmem:[#allocation6 + $0x48] sm:$0xff]
    %v1101 = vld [vmem:[#allocation6 + $0x50] sm:$0xff]
    %v1102 = vld [vmem:[#allocation6 + $0x58] sm:$0xff]
    %v1103 = vld [vmem:[#allocation6 + $0x60] sm:$0xff]
    %v1104 = vld [vmem:[#allocation6 + $0x68] sm:$0xff]
    %v1105 = vld [vmem:[#allocation6 + $0x70] sm:$0xff]
    %v1106 = vld [vmem:[#allocation6 + $0x78] sm:$0xff]
    %v1107 = vld [vmem:[%s5] sm:$0x1]
    %v1109 = vlaneseq
    %v1110 = vshrl.u32 %v1109, 7
    %v1111 = vsub.s32 0, %v1110
    %v1112 = vrot.slane %v1107, %v1111
    %1114 = vmatprep.subr.mxu0 0.0
    %1115 = vmatpush1.msra.mxu0 %v1091
    %1116 = vmatprep.subr.mxu0 0.0
    %1117 = vmatpush1.msra.mxu0 %v1092
    %1118 = vmatprep.subr.mxu0 0.0
    %1119 = vmatpush1.msra.mxu0 %v1093
    %1120 = vmatprep.subr.mxu0 0.0
    %1121 = vmatpush1.msra.mxu0 %v1094
    %1122 = vmatprep.subr.mxu0 0.0
    %1123 = vmatpush1.msra.mxu0 %v1095
    %1124 = vmatprep.subr.mxu0 0.0
    %1125 = vmatpush1.msra.mxu0 %v1096
    %1126 = vmatprep.subr.mxu0 0.0
    %1127 = vmatpush1.msra.mxu0 %v1097
    %1128 = vmatprep.subr.mxu0 0.0
    %1129 = vmatpush1.msra.mxu0 %v1098
    %1130 = vmatprep.subr.mxu0 0.0
    %1131 = vmatpush1.msra.mxu0 %v1099
    %1132 = vmatprep.subr.mxu0 0.0
    %1133 = vmatpush1.msra.mxu0 %v1100
    %1134 = vmatprep.subr.mxu0 0.0
    %1135 = vmatpush1.msra.mxu0 %v1101
    %1136 = vmatprep.subr.mxu0 0.0
    %1137 = vmatpush1.msra.mxu0 %v1102
    %1138 = vmatprep.subr.mxu0 0.0
    %1139 = vmatpush1.msra.mxu0 %v1103
    %1140 = vmatprep.subr.mxu0 0.0
    %1141 = vmatpush1.msra.mxu0 %v1104
    %1142 = vmatprep.subr.mxu0 0.0
    %1143 = vmatpush1.msra.mxu0 %v1105
    %1144 = vmatprep.subr.mxu0 0.0
    %1145 = vmatpush1.msra.mxu0 %v1106
    %1146 = vmatprep.subr.mxu0 0.0
    %1147 = vmatpush1.msra.mxu0 0.0
    %1148 = vmatprep.subr.mxu0 0.0
    %1149 = vmatpush1.msra.mxu0 0.0
    %1150 = vmatprep.subr.mxu0 0.0
    %1151 = vmatpush1.msra.mxu0 0.0
    %1152 = vmatprep.subr.mxu0 0.0
    %1153 = vmatpush1.msra.mxu0 0.0
    %1154 = vmatprep.subr.mxu0 0.0
    %1155 = vmatpush1.msra.mxu0 0.0
    %1156 = vmatprep.subr.mxu0 0.0
    %1157 = vmatpush1.msra.mxu0 0.0
    %1158 = vmatprep.subr.mxu0 0.0
    %1159 = vmatpush1.msra.mxu0 0.0
    %1160 = vmatprep.subr.mxu0 0.0
    %1161 = vmatpush1.msra.mxu0 0.0
    %1162 = vmatprep.subr.mxu0 0.0
    %1163 = vmatpush1.msra.mxu0 0.0
    %1164 = vmatprep.subr.mxu0 0.0
    %1165 = vmatpush1.msra.mxu0 0.0
    %1166 = vmatprep.subr.mxu0 0.0
    %1167 = vmatpush1.msra.mxu0 0.0
    %1168 = vmatprep.subr.mxu0 0.0
    %1169 = vmatpush1.msra.mxu0 0.0
    %1170 = vmatprep.subr.mxu0 0.0
    %1171 = vmatpush1.msra.mxu0 0.0
    %1172 = vmatprep.subr.mxu0 0.0
    %1173 = vmatpush1.msra.mxu0 0.0
    %1174 = vmatprep.subr.mxu0 0.0
    %1175 = vmatpush1.msra.mxu0 0.0
    %1176 = vmatprep.subr.mxu0 0.0
    %1177 = vmatpush1.msra.mxu0 0.0
    %1178 = vmatprep.mubr.f32.mxu0 0.0
    %1179 = vmatmul.mubr.f32.gmra.mrb[0].mxu0 %v891
    %v1180 = vpop.f32.mrb[0].mxu0
    %v1181 = vadd.f32 %v1112, %v1180
    %v1182 = vpop.f32.mrb[0].mxu0
    %1183 = vdwg.mxu0
    %v1184 = vadd.f32 %v1090, %v1181
    %v1185 = vxor.u32 %v1184, 2147483648
    %v1186 = vmul.f32 %v1185, 1.442695
    %v1187 = vpow.pop %v1186
    %v1188 = vadd.f32 %v1187, 1.0
    %v1189 = vrcp.pop %v1188
    %v1190 = vmul.f32 1.0, %v1189
    %1191 = vrot.lane.b32.xlu0 %v1190, 96
    %v1192 = vpop.permute.xlu0 %1191
    %1193 = vrot.lane.b32.xlu0 %v1190, 64
    %v1194 = vpop.permute.xlu0 %1193
    %v1195 = vmul.f32 %v1192, %v1181
    %v1196 = vadd.f32 %v1090, %v1195
    %v1197 = vtanh.pop %v1196
    %v1198 = vsub.f32 %v891, %v1197
    %v1199 = vmul.f32 %v1194, %v1198
    %v1200 = vadd.f32 %v1197, %v1199
    %v1201 = vld [vmem:[%s348] sm:$0xff]
    %1202 = vmatprep.subr.mxu0 0.0
    %1203 = vmatpush1.msra.mxu0 %v1091
    %1204 = vmatprep.subr.mxu0 0.0
    %1205 = vmatpush1.msra.mxu0 %v1092
    %1206 = vmatprep.subr.mxu0 0.0
    %1207 = vmatpush1.msra.mxu0 %v1093
    %1208 = vmatprep.subr.mxu0 0.0
    %1209 = vmatpush1.msra.mxu0 %v1094
    %1210 = vmatprep.subr.mxu0 0.0
    %1211 = vmatpush1.msra.mxu0 %v1095
    %1212 = vmatprep.subr.mxu0 0.0
    %1213 = vmatpush1.msra.mxu0 %v1096
    %1214 = vmatprep.subr.mxu0 0.0
    %1215 = vmatpush1.msra.mxu0 %v1097
    %1216 = vmatprep.subr.mxu0 0.0
    %1217 = vmatpush1.msra.mxu0 %v1098
    %1218 = vmatprep.subr.mxu0 0.0
    %1219 = vmatpush1.msra.mxu0 %v1099
    %1220 = vmatprep.subr.mxu0 0.0
    %1221 = vmatpush1.msra.mxu0 %v1100
    %1222 = vmatprep.subr.mxu0 0.0
    %1223 = vmatpush1.msra.mxu0 %v1101
    %1224 = vmatprep.subr.mxu0 0.0
    %1225 = vmatpush1.msra.mxu0 %v1102
    %1226 = vmatprep.subr.mxu0 0.0
    %1227 = vmatpush1.msra.mxu0 %v1103
    %1228 = vmatprep.subr.mxu0 0.0
    %1229 = vmatpush1.msra.mxu0 %v1104
    %1230 = vmatprep.subr.mxu0 0.0
    %1231 = vmatpush1.msra.mxu0 %v1105
    %1232 = vmatprep.subr.mxu0 0.0
    %1233 = vmatpush1.msra.mxu0 %v1106
    %1234 = vmatprep.subr.mxu0 0.0
    %1235 = vmatpush1.msra.mxu0 0.0
    %1236 = vmatprep.subr.mxu0 0.0
    %1237 = vmatpush1.msra.mxu0 0.0
    %1238 = vmatprep.subr.mxu0 0.0
    %1239 = vmatpush1.msra.mxu0 0.0
    %1240 = vmatprep.subr.mxu0 0.0
    %1241 = vmatpush1.msra.mxu0 0.0
    %1242 = vmatprep.subr.mxu0 0.0
    %1243 = vmatpush1.msra.mxu0 0.0
    %1244 = vmatprep.subr.mxu0 0.0
    %1245 = vmatpush1.msra.mxu0 0.0
    %1246 = vmatprep.subr.mxu0 0.0
    %1247 = vmatpush1.msra.mxu0 0.0
    %1248 = vmatprep.subr.mxu0 0.0
    %1249 = vmatpush1.msra.mxu0 0.0
    %1250 = vmatprep.subr.mxu0 0.0
    %1251 = vmatpush1.msra.mxu0 0.0
    %1252 = vmatprep.subr.mxu0 0.0
    %1253 = vmatpush1.msra.mxu0 0.0
    %1254 = vmatprep.subr.mxu0 0.0
    %1255 = vmatpush1.msra.mxu0 0.0
    %1256 = vmatprep.subr.mxu0 0.0
    %1257 = vmatpush1.msra.mxu0 0.0
    %1258 = vmatprep.subr.mxu0 0.0
    %1259 = vmatpush1.msra.mxu0 0.0
    %1260 = vmatprep.subr.mxu0 0.0
    %1261 = vmatpush1.msra.mxu0 0.0
    %1262 = vmatprep.subr.mxu0 0.0
    %1263 = vmatpush1.msra.mxu0 0.0
    %1264 = vmatprep.subr.mxu0 0.0
    %1265 = vmatpush1.msra.mxu0 0.0
    %1266 = vmatprep.mubr.f32.mxu0 0.0
    %1267 = vmatmul.mubr.f32.gmra.mrb[0].mxu0 %v1200
    %v1268 = vpop.f32.mrb[0].mxu0
    %v1269 = vadd.f32 %v1112, %v1268
    %v1270 = vpop.f32.mrb[0].mxu0
    %1271 = vdwg.mxu0
    %v1272 = vadd.f32 %v1201, %v1269
    %v1273 = vxor.u32 %v1272, 2147483648
    %v1274 = vmul.f32 %v1273, 1.442695
    %v1275 = vpow.pop %v1274
    %v1276 = vadd.f32 %v1275, 1.0
    %v1277 = vrcp.pop %v1276
    %v1278 = vmul.f32 1.0, %v1277
    %1279 = vrot.lane.b32.xlu0 %v1278, 96
    %v1280 = vpop.permute.xlu0 %1279
    %1281 = vrot.lane.b32.xlu0 %v1278, 64
    %v1282 = vpop.permute.xlu0 %1281
    %v1283 = vmul.f32 %v1280, %v1269
    %v1284 = vadd.f32 %v1201, %v1283
    %v1285 = vtanh.pop %v1284
    %v1286 = vsub.f32 %v1200, %v1285
    %v1287 = vmul.f32 %v1282, %v1286
    %v1288 = vadd.f32 %v1285, %v1287
    %v1289 = vld [vmem:[%s434] sm:$0xff]
    %1290 = vmatprep.subr.mxu0 0.0
    %1291 = vmatpush1.msra.mxu0 %v1091
    %1292 = vmatprep.subr.mxu0 0.0
    %1293 = vmatpush1.msra.mxu0 %v1092
    %1294 = vmatprep.subr.mxu0 0.0
    %1295 = vmatpush1.msra.mxu0 %v1093
    %1296 = vmatprep.subr.mxu0 0.0
    %1297 = vmatpush1.msra.mxu0 %v1094
    %1298 = vmatprep.subr.mxu0 0.0
    %1299 = vmatpush1.msra.mxu0 %v1095
    %1300 = vmatprep.subr.mxu0 0.0
    %1301 = vmatpush1.msra.mxu0 %v1096
    %1302 = vmatprep.subr.mxu0 0.0
    %1303 = vmatpush1.msra.mxu0 %v1097
    %1304 = vmatprep.subr.mxu0 0.0
    %1305 = vmatpush1.msra.mxu0 %v1098
    %1306 = vmatprep.subr.mxu0 0.0
    %1307 = vmatpush1.msra.mxu0 %v1099
    %1308 = vmatprep.subr.mxu0 0.0
    %1309 = vmatpush1.msra.mxu0 %v1100
    %1310 = vmatprep.subr.mxu0 0.0
    %1311 = vmatpush1.msra.mxu0 %v1101
    %1312 = vmatprep.subr.mxu0 0.0
    %1313 = vmatpush1.msra.mxu0 %v1102
    %1314 = vmatprep.subr.mxu0 0.0
    %1315 = vmatpush1.msra.mxu0 %v1103
    %1316 = vmatprep.subr.mxu0 0.0
    %1317 = vmatpush1.msra.mxu0 %v1104
    %1318 = vmatprep.subr.mxu0 0.0
    %1319 = vmatpush1.msra.mxu0 %v1105
    %1320 = vmatprep.subr.mxu0 0.0
    %1321 = vmatpush1.msra.mxu0 %v1106
    %1322 = vmatprep.subr.mxu0 0.0
    %1323 = vmatpush1.msra.mxu0 0.0
    %1324 = vmatprep.subr.mxu0 0.0
    %1325 = vmatpush1.msra.mxu0 0.0
    %1326 = vmatprep.subr.mxu0 0.0
    %1327 = vmatpush1.msra.mxu0 0.0
    %1328 = vmatprep.subr.mxu0 0.0
    %1329 = vmatpush1.msra.mxu0 0.0
    %1330 = vmatprep.subr.mxu0 0.0
    %1331 = vmatpush1.msra.mxu0 0.0
    %1332 = vmatprep.subr.mxu0 0.0
    %1333 = vmatpush1.msra.mxu0 0.0
    %1334 = vmatprep.subr.mxu0 0.0
    %1335 = vmatpush1.msra.mxu0 0.0
    %1336 = vmatprep.subr.mxu0 0.0
    %1337 = vmatpush1.msra.mxu0 0.0
    %1338 = vmatprep.subr.mxu0 0.0
    %1339 = vmatpush1.msra.mxu0 0.0
    %1340 = vmatprep.subr.mxu0 0.0
    %1341 = vmatpush1.msra.mxu0 0.0
    %1342 = vmatprep.subr.mxu0 0.0
    %1343 = vmatpush1.msra.mxu0 0.0
    %1344 = vmatprep.subr.mxu0 0.0
    %1345 = vmatpush1.msra.mxu0 0.0
    %1346 = vmatprep.subr.mxu0 0.0
    %1347 = vmatpush1.msra.mxu0 0.0
    %1348 = vmatprep.subr.mxu0 0.0
    %1349 = vmatpush1.msra.mxu0 0.0
    %1350 = vmatprep.subr.mxu0 0.0
    %1351 = vmatpush1.msra.mxu0 0.0
    %1352 = vmatprep.subr.mxu0 0.0
    %1353 = vmatpush1.msra.mxu0 0.0
    %1354 = vmatprep.mubr.f32.mxu0 0.0
    %1355 = vmatmul.mubr.f32.gmra.mrb[0].mxu0 %v1288
    %v1356 = vpop.f32.mrb[0].mxu0
    %v1357 = vadd.f32 %v1112, %v1356
    %v1358 = vpop.f32.mrb[0].mxu0
    %1359 = vdwg.mxu0
    %v1360 = vadd.f32 %v1289, %v1357
    %v1361 = vxor.u32 %v1360, 2147483648
    %v1362 = vmul.f32 %v1361, 1.442695
    %v1363 = vpow.pop %v1362
    %v1364 = vadd.f32 %v1363, 1.0
    %v1365 = vrcp.pop %v1364
    %v1366 = vmul.f32 1.0, %v1365
    %1367 = vrot.lane.b32.xlu0 %v1366, 96
    %v1368 = vpop.permute.xlu0 %1367
    %1369 = vrot.lane.b32.xlu0 %v1366, 64
    %v1370 = vpop.permute.xlu0 %1369
    %v1371 = vmul.f32 %v1368, %v1357
    %v1372 = vadd.f32 %v1289, %v1371
    %v1373 = vtanh.pop %v1372
    %v1374 = vsub.f32 %v1288, %v1373
    %v1375 = vmul.f32 %v1370, %v1374
    %v1376 = vadd.f32 %v1373, %v1375
    %v1377 = vld [vmem:[%s520] sm:$0xff]
    %1378 = vmatprep.subr.mxu0 0.0
    %1379 = vmatpush1.msra.mxu0 %v1091
    %1380 = vmatprep.subr.mxu0 0.0
    %1381 = vmatpush1.msra.mxu0 %v1092
    %1382 = vmatprep.subr.mxu0 0.0
    %1383 = vmatpush1.msra.mxu0 %v1093
    %1384 = vmatprep.subr.mxu0 0.0
    %1385 = vmatpush1.msra.mxu0 %v1094
    %1386 = vmatprep.subr.mxu0 0.0
    %1387 = vmatpush1.msra.mxu0 %v1095
    %1388 = vmatprep.subr.mxu0 0.0
    %1389 = vmatpush1.msra.mxu0 %v1096
    %1390 = vmatprep.subr.mxu0 0.0
    %1391 = vmatpush1.msra.mxu0 %v1097
    %1392 = vmatprep.subr.mxu0 0.0
    %1393 = vmatpush1.msra.mxu0 %v1098
    %1394 = vmatprep.subr.mxu0 0.0
    %1395 = vmatpush1.msra.mxu0 %v1099
    %1396 = vmatprep.subr.mxu0 0.0
    %1397 = vmatpush1.msra.mxu0 %v1100
    %1398 = vmatprep.subr.mxu0 0.0
    %1399 = vmatpush1.msra.mxu0 %v1101
    %1400 = vmatprep.subr.mxu0 0.0
    %1401 = vmatpush1.msra.mxu0 %v1102
    %1402 = vmatprep.subr.mxu0 0.0
    %1403 = vmatpush1.msra.mxu0 %v1103
    %1404 = vmatprep.subr.mxu0 0.0
    %1405 = vmatpush1.msra.mxu0 %v1104
    %1406 = vmatprep.subr.mxu0 0.0
    %1407 = vmatpush1.msra.mxu0 %v1105
    %1408 = vmatprep.subr.mxu0 0.0
    %1409 = vmatpush1.msra.mxu0 %v1106
    %1410 = vmatprep.subr.mxu0 0.0
    %1411 = vmatpush1.msra.mxu0 0.0
    %1412 = vmatprep.subr.mxu0 0.0
    %1413 = vmatpush1.msra.mxu0 0.0
    %1414 = vmatprep.subr.mxu0 0.0
    %1415 = vmatpush1.msra.mxu0 0.0
    %1416 = vmatprep.subr.mxu0 0.0
    %1417 = vmatpush1.msra.mxu0 0.0
    %1418 = vmatprep.subr.mxu0 0.0
    %1419 = vmatpush1.msra.mxu0 0.0
    %1420 = vmatprep.subr.mxu0 0.0
    %1421 = vmatpush1.msra.mxu0 0.0
    %1422 = vmatprep.subr.mxu0 0.0
    %1423 = vmatpush1.msra.mxu0 0.0
    %1424 = vmatprep.subr.mxu0 0.0
    %1425 = vmatpush1.msra.mxu0 0.0
    %1426 = vmatprep.subr.mxu0 0.0
    %1427 = vmatpush1.msra.mxu0 0.0
    %1428 = vmatprep.subr.mxu0 0.0
    %1429 = vmatpush1.msra.mxu0 0.0
    %1430 = vmatprep.subr.mxu0 0.0
    %1431 = vmatpush1.msra.mxu0 0.0
    %1432 = vmatprep.subr.mxu0 0.0
    %1433 = vmatpush1.msra.mxu0 0.0
    %1434 = vmatprep.subr.mxu0 0.0
    %1435 = vmatpush1.msra.mxu0 0.0
    %1436 = vmatprep.subr.mxu0 0.0
    %1437 = vmatpush1.msra.mxu0 0.0
    %1438 = vmatprep.subr.mxu0 0.0
    %1439 = vmatpush1.msra.mxu0 0.0
    %1440 = vmatprep.subr.mxu0 0.0
    %1441 = vmatpush1.msra.mxu0 0.0
    %1442 = vmatprep.mubr.f32.mxu0 0.0
    %1443 = vmatmul.mubr.f32.gmra.mrb[0].mxu0 %v1376
    %v1444 = vpop.f32.mrb[0].mxu0
    %v1445 = vadd.f32 %v1112, %v1444
    %v1446 = vpop.f32.mrb[0].mxu0
    %1447 = vdwg.mxu0
    %v1448 = vadd.f32 %v1377, %v1445
    %v1449 = vxor.u32 %v1448, 2147483648
    %v1450 = vmul.f32 %v1449, 1.442695
    %v1451 = vpow.pop %v1450
    %v1452 = vadd.f32 %v1451, 1.0
    %v1453 = vrcp.pop %v1452
    %v1454 = vmul.f32 1.0, %v1453
    %1455 = vrot.lane.b32.xlu0 %v1454, 96
    %v1456 = vpop.permute.xlu0 %1455
    %1457 = vrot.lane.b32.xlu0 %v1454, 64
    %v1458 = vpop.permute.xlu0 %1457
    %v1459 = vmul.f32 %v1456, %v1445
    %v1460 = vadd.f32 %v1377, %v1459
    %v1461 = vtanh.pop %v1460
    %v1462 = vsub.f32 %v1376, %v1461
    %v1463 = vmul.f32 %v1458, %v1462
    %v1464 = vadd.f32 %v1461, %v1463
    %v1465 = vld [vmem:[%s606] sm:$0xff]
    %1466 = vmatprep.subr.mxu0 0.0
    %1467 = vmatpush1.msra.mxu0 %v1091
    %1468 = vmatprep.subr.mxu0 0.0
    %1469 = vmatpush1.msra.mxu0 %v1092
    %1470 = vmatprep.subr.mxu0 0.0
    %1471 = vmatpush1.msra.mxu0 %v1093
    %1472 = vmatprep.subr.mxu0 0.0
    %1473 = vmatpush1.msra.mxu0 %v1094
    %1474 = vmatprep.subr.mxu0 0.0
    %1475 = vmatpush1.msra.mxu0 %v1095
    %1476 = vmatprep.subr.mxu0 0.0
    %1477 = vmatpush1.msra.mxu0 %v1096
    %1478 = vmatprep.subr.mxu0 0.0
    %1479 = vmatpush1.msra.mxu0 %v1097
    %1480 = vmatprep.subr.mxu0 0.0
    %1481 = vmatpush1.msra.mxu0 %v1098
    %1482 = vmatprep.subr.mxu0 0.0
    %1483 = vmatpush1.msra.mxu0 %v1099
    %1484 = vmatprep.subr.mxu0 0.0
    %1485 = vmatpush1.msra.mxu0 %v1100
    %1486 = vmatprep.subr.mxu0 0.0
    %1487 = vmatpush1.msra.mxu0 %v1101
    %1488 = vmatprep.subr.mxu0 0.0
    %1489 = vmatpush1.msra.mxu0 %v1102
    %1490 = vmatprep.subr.mxu0 0.0
    %1491 = vmatpush1.msra.mxu0 %v1103
    %1492 = vmatprep.subr.mxu0 0.0
    %1493 = vmatpush1.msra.mxu0 %v1104
    %1494 = vmatprep.subr.mxu0 0.0
    %1495 = vmatpush1.msra.mxu0 %v1105
    %1496 = vmatprep.subr.mxu0 0.0
    %1497 = vmatpush1.msra.mxu0 %v1106
    %1498 = vmatprep.subr.mxu0 0.0
    %1499 = vmatpush1.msra.mxu0 0.0
    %1500 = vmatprep.subr.mxu0 0.0
    %1501 = vmatpush1.msra.mxu0 0.0
    %1502 = vmatprep.subr.mxu0 0.0
    %1503 = vmatpush1.msra.mxu0 0.0
    %1504 = vmatprep.subr.mxu0 0.0
    %1505 = vmatpush1.msra.mxu0 0.0
    %1506 = vmatprep.subr.mxu0 0.0
    %1507 = vmatpush1.msra.mxu0 0.0
    %1508 = vmatprep.subr.mxu0 0.0
    %1509 = vmatpush1.msra.mxu0 0.0
    %1510 = vmatprep.subr.mxu0 0.0
    %1511 = vmatpush1.msra.mxu0 0.0
    %1512 = vmatprep.subr.mxu0 0.0
    %1513 = vmatpush1.msra.mxu0 0.0
    %1514 = vmatprep.subr.mxu0 0.0
    %1515 = vmatpush1.msra.mxu0 0.0
    %1516 = vmatprep.subr.mxu0 0.0
    %1517 = vmatpush1.msra.mxu0 0.0
    %1518 = vmatprep.subr.mxu0 0.0
    %1519 = vmatpush1.msra.mxu0 0.0
    %1520 = vmatprep.subr.mxu0 0.0
    %1521 = vmatpush1.msra.mxu0 0.0
    %1522 = vmatprep.subr.mxu0 0.0
    %1523 = vmatpush1.msra.mxu0 0.0
    %1524 = vmatprep.subr.mxu0 0.0
    %1525 = vmatpush1.msra.mxu0 0.0
    %1526 = vmatprep.subr.mxu0 0.0
    %1527 = vmatpush1.msra.mxu0 0.0
    %1528 = vmatprep.subr.mxu0 0.0
    %1529 = vmatpush1.msra.mxu0 0.0
    %1530 = vmatprep.mubr.f32.mxu0 0.0
    %1531 = vmatmul.mubr.f32.gmra.mrb[0].mxu0 %v1464
    %v1532 = vpop.f32.mrb[0].mxu0
    %v1533 = vadd.f32 %v1112, %v1532
    %v1534 = vpop.f32.mrb[0].mxu0
    %1535 = vdwg.mxu0
    %v1536 = vadd.f32 %v1465, %v1533
    %v1537 = vxor.u32 %v1536, 2147483648
    %v1538 = vmul.f32 %v1537, 1.442695
    %v1539 = vpow.pop %v1538
    %v1540 = vadd.f32 %v1539, 1.0
    %v1541 = vrcp.pop %v1540
    %v1542 = vmul.f32 1.0, %v1541
    %1543 = vrot.lane.b32.xlu0 %v1542, 96
    %v1544 = vpop.permute.xlu0 %1543
    %1545 = vrot.lane.b32.xlu0 %v1542, 64
    %v1546 = vpop.permute.xlu0 %1545
    %v1547 = vmul.f32 %v1544, %v1533
    %v1548 = vadd.f32 %v1465, %v1547
    %v1549 = vtanh.pop %v1548
    %v1550 = vsub.f32 %v1464, %v1549
    %v1551 = vmul.f32 %v1546, %v1550
    %v1552 = vadd.f32 %v1549, %v1551
    %v1553 = vld [vmem:[%s692] sm:$0xff]
    %1554 = vmatprep.subr.mxu0 0.0
    %1555 = vmatpush1.msra.mxu0 %v1091
    %1556 = vmatprep.subr.mxu0 0.0
    %1557 = vmatpush1.msra.mxu0 %v1092
    %1558 = vmatprep.subr.mxu0 0.0
    %1559 = vmatpush1.msra.mxu0 %v1093
    %1560 = vmatprep.subr.mxu0 0.0
    %1561 = vmatpush1.msra.mxu0 %v1094
    %1562 = vmatprep.subr.mxu0 0.0
    %1563 = vmatpush1.msra.mxu0 %v1095
    %1564 = vmatprep.subr.mxu0 0.0
    %1565 = vmatpush1.msra.mxu0 %v1096
    %1566 = vmatprep.subr.mxu0 0.0
    %1567 = vmatpush1.msra.mxu0 %v1097
    %1568 = vmatprep.subr.mxu0 0.0
    %1569 = vmatpush1.msra.mxu0 %v1098
    %1570 = vmatprep.subr.mxu0 0.0
    %1571 = vmatpush1.msra.mxu0 %v1099
    %1572 = vmatprep.subr.mxu0 0.0
    %1573 = vmatpush1.msra.mxu0 %v1100
    %1574 = vmatprep.subr.mxu0 0.0
    %1575 = vmatpush1.msra.mxu0 %v1101
    %1576 = vmatprep.subr.mxu0 0.0
    %1577 = vmatpush1.msra.mxu0 %v1102
    %1578 = vmatprep.subr.mxu0 0.0
    %1579 = vmatpush1.msra.mxu0 %v1103
    %1580 = vmatprep.subr.mxu0 0.0
    %1581 = vmatpush1.msra.mxu0 %v1104
    %1582 = vmatprep.subr.mxu0 0.0
    %1583 = vmatpush1.msra.mxu0 %v1105
    %1584 = vmatprep.subr.mxu0 0.0
    %1585 = vmatpush1.msra.mxu0 %v1106
    %1586 = vmatprep.subr.mxu0 0.0
    %1587 = vmatpush1.msra.mxu0 0.0
    %1588 = vmatprep.subr.mxu0 0.0
    %1589 = vmatpush1.msra.mxu0 0.0
    %1590 = vmatprep.subr.mxu0 0.0
    %1591 = vmatpush1.msra.mxu0 0.0
    %1592 = vmatprep.subr.mxu0 0.0
    %1593 = vmatpush1.msra.mxu0 0.0
    %1594 = vmatprep.subr.mxu0 0.0
    %1595 = vmatpush1.msra.mxu0 0.0
    %1596 = vmatprep.subr.mxu0 0.0
    %1597 = vmatpush1.msra.mxu0 0.0
    %1598 = vmatprep.subr.mxu0 0.0
    %1599 = vmatpush1.msra.mxu0 0.0
    %1600 = vmatprep.subr.mxu0 0.0
    %1601 = vmatpush1.msra.mxu0 0.0
    %1602 = vmatprep.subr.mxu0 0.0
    %1603 = vmatpush1.msra.mxu0 0.0
    %1604 = vmatprep.subr.mxu0 0.0
    %1605 = vmatpush1.msra.mxu0 0.0
    %1606 = vmatprep.subr.mxu0 0.0
    %1607 = vmatpush1.msra.mxu0 0.0
    %1608 = vmatprep.subr.mxu0 0.0
    %1609 = vmatpush1.msra.mxu0 0.0
    %1610 = vmatprep.subr.mxu0 0.0
    %1611 = vmatpush1.msra.mxu0 0.0
    %1612 = vmatprep.subr.mxu0 0.0
    %1613 = vmatpush1.msra.mxu0 0.0
    %1614 = vmatprep.subr.mxu0 0.0
    %1615 = vmatpush1.msra.mxu0 0.0
    %1616 = vmatprep.subr.mxu0 0.0
    %1617 = vmatpush1.msra.mxu0 0.0
    %1618 = vmatprep.mubr.f32.mxu0 0.0
    %1619 = vmatmul.mubr.f32.gmra.mrb[0].mxu0 %v1552
    %v1620 = vpop.f32.mrb[0].mxu0
    %v1621 = vadd.f32 %v1112, %v1620
    %v1622 = vpop.f32.mrb[0].mxu0
    %1623 = vdwg.mxu0
    %v1624 = vadd.f32 %v1553, %v1621
    %v1625 = vxor.u32 %v1624, 2147483648
    %v1626 = vmul.f32 %v1625, 1.442695
    %v1627 = vpow.pop %v1626
    %v1628 = vadd.f32 %v1627, 1.0
    %v1629 = vrcp.pop %v1628
    %v1630 = vmul.f32 1.0, %v1629
    %1631 = vrot.lane.b32.xlu0 %v1630, 96
    %v1632 = vpop.permute.xlu0 %1631
    %1633 = vrot.lane.b32.xlu0 %v1630, 64
    %v1634 = vpop.permute.xlu0 %1633
    %v1635 = vmul.f32 %v1632, %v1621
    %v1636 = vadd.f32 %v1553, %v1635
    %v1637 = vtanh.pop %v1636
    %v1638 = vsub.f32 %v1552, %v1637
    %v1639 = vmul.f32 %v1634, %v1638
    %v1640 = vadd.f32 %v1637, %v1639
    %v1641 = vld [vmem:[%s778] sm:$0xff]
    %1642 = vmatprep.subr.mxu0 0.0
    %1643 = vmatpush1.msra.mxu0 %v1091
    %1644 = vmatprep.subr.mxu0 0.0
    %1645 = vmatpush1.msra.mxu0 %v1092
    %1646 = vmatprep.subr.mxu0 0.0
    %1647 = vmatpush1.msra.mxu0 %v1093
    %1648 = vmatprep.subr.mxu0 0.0
    %1649 = vmatpush1.msra.mxu0 %v1094
    %1650 = vmatprep.subr.mxu0 0.0
    %1651 = vmatpush1.msra.mxu0 %v1095
    %1652 = vmatprep.subr.mxu0 0.0
    %1653 = vmatpush1.msra.mxu0 %v1096
    %1654 = vmatprep.subr.mxu0 0.0
    %1655 = vmatpush1.msra.mxu0 %v1097
    %1656 = vmatprep.subr.mxu0 0.0
    %1657 = vmatpush1.msra.mxu0 %v1098
    %1658 = vmatprep.subr.mxu0 0.0
    %1659 = vmatpush1.msra.mxu0 %v1099
    %1660 = vmatprep.subr.mxu0 0.0
    %1661 = vmatpush1.msra.mxu0 %v1100
    %1662 = vmatprep.subr.mxu0 0.0
    %1663 = vmatpush1.msra.mxu0 %v1101
    %1664 = vmatprep.subr.mxu0 0.0
    %1665 = vmatpush1.msra.mxu0 %v1102
    %1666 = vmatprep.subr.mxu0 0.0
    %1667 = vmatpush1.msra.mxu0 %v1103
    %1668 = vmatprep.subr.mxu0 0.0
    %1669 = vmatpush1.msra.mxu0 %v1104
    %1670 = vmatprep.subr.mxu0 0.0
    %1671 = vmatpush1.msra.mxu0 %v1105
    %1672 = vmatprep.subr.mxu0 0.0
    %1673 = vmatpush1.msra.mxu0 %v1106
    %1674 = vmatprep.subr.mxu0 0.0
    %1675 = vmatpush1.msra.mxu0 0.0
    %1676 = vmatprep.subr.mxu0 0.0
    %1677 = vmatpush1.msra.mxu0 0.0
    %1678 = vmatprep.subr.mxu0 0.0
    %1679 = vmatpush1.msra.mxu0 0.0
    %1680 = vmatprep.subr.mxu0 0.0
    %1681 = vmatpush1.msra.mxu0 0.0
    %1682 = vmatprep.subr.mxu0 0.0
    %1683 = vmatpush1.msra.mxu0 0.0
    %1684 = vmatprep.subr.mxu0 0.0
    %1685 = vmatpush1.msra.mxu0 0.0
    %1686 = vmatprep.subr.mxu0 0.0
    %1687 = vmatpush1.msra.mxu0 0.0
    %1688 = vmatprep.subr.mxu0 0.0
    %1689 = vmatpush1.msra.mxu0 0.0
    %1690 = vmatprep.subr.mxu0 0.0
    %1691 = vmatpush1.msra.mxu0 0.0
    %1692 = vmatprep.subr.mxu0 0.0
    %1693 = vmatpush1.msra.mxu0 0.0
    %1694 = vmatprep.subr.mxu0 0.0
    %1695 = vmatpush1.msra.mxu0 0.0
    %1696 = vmatprep.subr.mxu0 0.0
    %1697 = vmatpush1.msra.mxu0 0.0
    %1698 = vmatprep.subr.mxu0 0.0
    %1699 = vmatpush1.msra.mxu0 0.0
    %1700 = vmatprep.subr.mxu0 0.0
    %1701 = vmatpush1.msra.mxu0 0.0
    %1702 = vmatprep.subr.mxu0 0.0
    %1703 = vmatpush1.msra.mxu0 0.0
    %1704 = vmatprep.subr.mxu0 0.0
    %1705 = vmatpush1.msra.mxu0 0.0
    %1706 = vmatprep.mubr.f32.mxu0 0.0
    %1707 = vmatmul.mubr.f32.gmra.mrb[0].mxu0 %v1640
    %v1708 = vpop.f32.mrb[0].mxu0
    %v1709 = vadd.f32 %v1112, %v1708
    %v1710 = vpop.f32.mrb[0].mxu0
    %1711 = vdwg.mxu0
    %v1712 = vadd.f32 %v1641, %v1709
    %v1713 = vxor.u32 %v1712, 2147483648
    %v1714 = vmul.f32 %v1713, 1.442695
    %v1715 = vpow.pop %v1714
    %v1716 = vadd.f32 %v1715, 1.0
    %v1717 = vrcp.pop %v1716
    %v1718 = vmul.f32 1.0, %v1717
    %1719 = vrot.lane.b32.xlu0 %v1718, 96
    %v1720 = vpop.permute.xlu0 %1719
    %1721 = vrot.lane.b32.xlu0 %v1718, 64
    %v1722 = vpop.permute.xlu0 %1721
    %v1723 = vmul.f32 %v1720, %v1709
    %v1724 = vadd.f32 %v1641, %v1723
    %v1725 = vtanh.pop %v1724
    %v1726 = vsub.f32 %v1640, %v1725
    %v1727 = vmul.f32 %v1722, %v1726
    %v1728 = vadd.f32 %v1725, %v1727
    %1729 = vst [vmem:[%s11] sm:$0xff] %v1728
    // Predicated region
    $region58: #{decoder_rnn_forward.1} parent=1 // pred_check
      _
    $region59: #{decoder_rnn_forward.1} parent=1 // pred_check_branch
      %1731 = sbr.rel (0) target = $region61
    $region60: #{decoder_rnn_forward.1} parent=1 // pred_region
      %s1733 = ssub.s32 128, 128
      %1734 = vsyncadd [#allocation5], %s1733
      %s1736 = sshll.u32 [#allocation11], 4
      %s1737 = int_to_ptr.vmem [resolvable:$true] %s1736
      %1739 = dma.vmem_to_hbm [thread:$0]  %s1737, 128, %s10, [#allocation5]
    $region61: #{decoder_rnn_forward.1} parent=1 // pred_fallthru
      _
    // Predicated region
    $region62: #{decoder_rnn_forward.1} parent=1 // pred_check
      _
    $region63: #{decoder_rnn_forward.1} parent=1 // pred_check_branch
      %1741 = sbr.rel (0) target = $region65
    $region64: #{decoder_rnn_forward.1} parent=1 // pred_region
      _
    $region65: #{decoder_rnn_forward.1} parent=1 // pred_fallthru
      _
    // Predicated region
    $region66: #{decoder_rnn_forward.1} parent=1 // pred_check
      _
    $region67: #{decoder_rnn_forward.1} parent=1 // pred_check_branch
      %1743 = sbr.rel (0) target = $region69
    $region68: #{decoder_rnn_forward.1} parent=1 // pred_region
      %1744 = dma.done [#allocation5], 128
    $region69: #{decoder_rnn_forward.1} parent=1 // pred_fallthru
      _
    // Predicated region
    $region70: #{decoder_rnn_forward.1} parent=1 // pred_check
      _
    $region71: #{decoder_rnn_forward.1} parent=1 // pred_check_branch
      %1746 = sbr.rel (0) target = $region73
    $region72: #{decoder_rnn_forward.1} parent=1 // pred_region
      _
    $region73: #{decoder_rnn_forward.1} parent=1 // pred_fallthru
      _
    %1747 = vsyncpa [#allocation4], 1
    %1748 = vsyncpa [#allocation7], 1
    %1749 = vsyncpa [#allocation10], 1
    %1750 = vsyncpa [#allocation5], 1

</llo_original>
